<compile_context>
chip_gen: v5e
topology: v5e:2x2
jax: 0.10.0
libtpu: 0.0.40
codegen_flags: <defaults>
</compile_context>

<pallas_src>
import math
from functools import partial

import jax
import jax.numpy as jnp
from jax import lax
from jax.experimental import pallas as pl
from jax.experimental.pallas import tpu as pltpu

_VMEM_LIMIT = 48 * 1024 * 1024          # explicit scoped-VMEM budget (fits v5e/v6e/v7x)
_GELU_C = math.sqrt(2.0 / math.pi)
_LN_EPS = 1e-5
_MASK_VALUE = -1e30                     # keep in f32; overflows bf16 to -inf


def _pick_tile(dim, target, align):
    """Largest multiple of `align` <= target that divides dim, else full dim."""
    if dim <= target:
        return dim
    t = (target // align) * align
    while t >= align:
        if dim % t == 0:
            return t
        t -= align
    return dim  # fall back to an untiled axis (fine at the sizes used here)


# ----------------------------------------------------------------------------
# Fused (LayerNorm?) -> matmul (bf16, f32 acc) -> (+bias?) -> (+residual?)
# ----------------------------------------------------------------------------

def _make_linear_kernel(has_ln, has_bias, has_res, w_transposed):
    def kernel(*refs):
        it = iter(refs)
        x_ref = next(it)
        w_ref = next(it)
        g_ref = next(it) if has_ln else None
        be_ref = next(it) if has_ln else None
        b_ref = next(it) if has_bias else None
        r_ref = next(it) if has_res else None
        o_ref = next(it)

        x = x_ref[...]
        if has_ln:
            x = x.astype(jnp.float32)
            mu = jnp.mean(x, axis=-1, keepdims=True)
            var = jnp.mean(jnp.square(x - mu), axis=-1, keepdims=True)
            x = (x - mu) * lax.rsqrt(var + _LN_EPS) * g_ref[...] + be_ref[...]
        xb = x.astype(jnp.bfloat16)
        w = w_ref[...]
        if w_transposed:
            acc = lax.dot_general(xb, w, (((1,), (1,)), ((), ())),
                                  preferred_element_type=jnp.float32)
        else:
            acc = jnp.dot(xb, w, preferred_element_type=jnp.float32)
        if has_bias:
            acc = acc + b_ref[...]
        if has_res:
            acc = acc + r_ref[...].astype(jnp.float32)
        o_ref[...] = acc.astype(o_ref.dtype)
    return kernel


def fused_linear(x, w, b=None, *, ln=None, residual=None, w_transposed=False,
                 out_dtype=jnp.float32, tm_target=256, tn_target=512):
    M, K = x.shape
    N = w.shape[0] if w_transposed else w.shape[1]
    tm = _pick_tile(M, tm_target, 8)
    tn = _pick_tile(N, tn_target, 128)
    grid = (M // tm, N // tn)

    in_specs = [pl.BlockSpec((tm, K), lambda i, j: (i, 0))]
    args = [x]
    if w_transposed:
        in_specs.append(pl.BlockSpec((tn, K), lambda i, j: (j, 0)))
    else:
        in_specs.append(pl.BlockSpec((K, tn), lambda i, j: (0, j)))
    args.append(w)
    if ln is not None:
        g, beta = ln
        in_specs += [pl.BlockSpec((1, K), lambda i, j: (0, 0)),
                     pl.BlockSpec((1, K), lambda i, j: (0, 0))]
        args += [g.reshape(1, K).astype(jnp.float32),
                 beta.reshape(1, K).astype(jnp.float32)]
    if b is not None:
        in_specs.append(pl.BlockSpec((1, tn), lambda i, j: (0, j)))
        args.append(b.reshape(1, N).astype(jnp.float32))
    if residual is not None:
        in_specs.append(pl.BlockSpec((tm, tn), lambda i, j: (i, j)))
        args.append(residual)

    kernel = _make_linear_kernel(ln is not None, b is not None,
                                 residual is not None, w_transposed)
    return pl.pallas_call(
        kernel,
        out_shape=jax.ShapeDtypeStruct((M, N), out_dtype),
        grid=grid,
        in_specs=in_specs,
        out_specs=pl.BlockSpec((tm, tn), lambda i, j: (i, j)),
        compiler_params=pltpu.CompilerParams(
            dimension_semantics=("parallel", "parallel"),
            vmem_limit_bytes=_VMEM_LIMIT),
    )(*args)


# ----------------------------------------------------------------------------
# Fused GPT-2 MLP block: LN -> fc1 -> gelu_new -> fc2 -> +bias -> +residual
# (feed-forward axis is a reduction grid axis with a VMEM accumulator)
# ----------------------------------------------------------------------------

def _ln_mlp_kernel(x_ref, g_ref, be_ref, w1_ref, b1_ref, w2_ref, b2_ref,
                   o_ref, acc_ref, xn_ref):
    j = pl.program_id(1)

    @pl.when(j == 0)
    def _():
        x = x_ref[...]
        mu = jnp.mean(x, axis=-1, keepdims=True)
        var = jnp.mean(jnp.square(x - mu), axis=-1, keepdims=True)
        xn = (x - mu) * lax.rsqrt(var + _LN_EPS) * g_ref[...] + be_ref[...]
        xn_ref[...] = xn.astype(xn_ref.dtype)
        acc_ref[...] = jnp.zeros_like(acc_ref)

    h = jnp.dot(xn_ref[...], w1_ref[...],
                preferred_element_type=jnp.float32) + b1_ref[...]
    h = 0.5 * h * (1.0 + jnp.tanh(_GELU_C * (h + 0.044715 * h * h * h)))
    acc_ref[...] += jnp.dot(h.astype(jnp.bfloat16), w2_ref[...],
                            preferred_element_type=jnp.float32)

    @pl.when(j == pl.num_programs(1) - 1)
    def _():
        o_ref[...] = (acc_ref[...] + b2_ref[...] + x_ref[...]).astype(o_ref.dtype)


def ln_mlp(x, g, beta, w1, b1, w2, b2, *, tm_target=256, tff_target=512):
    M, D = x.shape
    Dff = w1.shape[1]
    tm = _pick_tile(M, tm_target, 8)
    tff = _pick_tile(Dff, tff_target, 128)
    grid = (M // tm, Dff // tff)
    return pl.pallas_call(
        _ln_mlp_kernel,
        out_shape=jax.ShapeDtypeStruct((M, D), jnp.float32),
        grid=grid,
        in_specs=[
            pl.BlockSpec((tm, D), lambda i, j: (i, 0)),    # x (pre-LN, residual)
            pl.BlockSpec((1, D), lambda i, j: (0, 0)),     # ln gamma
            pl.BlockSpec((1, D), lambda i, j: (0, 0)),     # ln beta
            pl.BlockSpec((D, tff), lambda i, j: (0, j)),   # w1 tile (streamed)
            pl.BlockSpec((1, tff), lambda i, j: (0, j)),   # b1 tile
            pl.BlockSpec((tff, D), lambda i, j: (j, 0)),   # w2 tile (streamed)
            pl.BlockSpec((1, D), lambda i, j: (0, 0)),     # b2
        ],
        out_specs=pl.BlockSpec((tm, D), lambda i, j: (i, 0)),
        scratch_shapes=[pltpu.VMEM((tm, D), jnp.float32),   # f32 accumulator
                        pltpu.VMEM((tm, D), jnp.bfloat16)], # cached LN(x)
        compiler_params=pltpu.CompilerParams(
            dimension_semantics=("parallel", "arbitrary"),
            vmem_limit_bytes=_VMEM_LIMIT),
    )(x,
      g.reshape(1, D).astype(jnp.float32), beta.reshape(1, D).astype(jnp.float32),
      w1, b1.reshape(1, Dff).astype(jnp.float32),
      w2, b2.reshape(1, D).astype(jnp.float32))


# ----------------------------------------------------------------------------
# Masked causal self-attention, online softmax over KV tiles
# ----------------------------------------------------------------------------

def _attn_kernel(q_ref, k_ref, v_ref, bias_ref, o_ref, m_ref, l_ref, acc_ref,
                 *, scale):
    kv = pl.program_id(2)

    @pl.when(kv == 0)
    def _():
        m_ref[...] = jnp.full_like(m_ref, -jnp.inf)
        l_ref[...] = jnp.zeros_like(l_ref)
        acc_ref[...] = jnp.zeros_like(acc_ref)

    q = q_ref[0, 0]            # (T, Dh)   bf16
    k = k_ref[0, 0]            # (tkv, Dh) bf16
    v = v_ref[0, 0]            # (tkv, Dh) bf16
    bias = bias_ref[0]         # (T, tkv)  f32 additive (causal + padding)

    s = jnp.dot(q, k.T, preferred_element_type=jnp.float32) * scale + bias
    m_prev = m_ref[...]
    m_new = jnp.maximum(m_prev, jnp.max(s, axis=-1, keepdims=True))
    alpha = jnp.exp(m_prev - m_new)
    p = jnp.exp(s - m_new)
    l_ref[...] = alpha * l_ref[...] + jnp.sum(p, axis=-1, keepdims=True)
    acc_ref[...] = alpha * acc_ref[...] + jnp.dot(
        p.astype(jnp.bfloat16), v, preferred_element_type=jnp.float32)
    m_ref[...] = m_new

    @pl.when(kv == pl.num_programs(2) - 1)
    def _():
        # Fully padded query rows see every key masked (-1e30) and produce a
        # uniform softmax over garbage; harmless — those rows are never used
        # because logits are sliced to the real token positions downstream.
        o_ref[0, 0] = (acc_ref[...] *
                       pl.reciprocal(l_ref[...], approx=True)).astype(o_ref.dtype)


def attention(q, k, v, attn_bias, *, tkv_target=512):
    # q, k, v: (B, H, T, Dh) bf16; attn_bias: (B, T, T) f32 additive
    B, H, T, Dh = q.shape
    scale = 1.0 / math.sqrt(Dh)
    tkv = _pick_tile(T, tkv_target, 128)
    nkv = T // tkv
    qo_spec = pl.BlockSpec((1, 1, T, Dh), lambda b, h, kv: (b, h, 0, 0))
    kv_spec = pl.BlockSpec((1, 1, tkv, Dh), lambda b, h, kv: (b, h, kv, 0))
    return pl.pallas_call(
        partial(_attn_kernel, scale=scale),
        out_shape=jax.ShapeDtypeStruct((B, H, T, Dh), jnp.bfloat16),
        grid=(B, H, nkv),
        in_specs=[qo_spec, kv_spec, kv_spec,
                  pl.BlockSpec((1, T, tkv), lambda b, h, kv: (b, 0, kv))],
        out_specs=qo_spec,
        scratch_shapes=[pltpu.VMEM((T, 1), jnp.float32),   # running max
                        pltpu.VMEM((T, 1), jnp.float32),   # running denom
                        pltpu.VMEM((T, Dh), jnp.float32)], # output accumulator
        compiler_params=pltpu.CompilerParams(
            dimension_semantics=("parallel", "parallel", "arbitrary"),
            vmem_limit_bytes=_VMEM_LIMIT),
    )(q, k, v, attn_bias)


# ----------------------------------------------------------------------------
# Parameter initialization (synthetic, deterministic).
# Matmul weights are stored in bf16 (MXU inputs); LN params / biases / wpe f32.
# ----------------------------------------------------------------------------

def init_params(key, *, vocab, n_pos, d_model, n_head, n_layer, img_dim, prefix_len):
    std = 0.02
    keys = iter(jax.random.split(key, 8 + 8 * n_layer))
    nxt = lambda: next(keys)
    D = d_model
    bf = jnp.bfloat16
    params = {
        "wte": (jax.random.normal(nxt(), (vocab, D), jnp.float32) * std).astype(bf),
        "wpe": jax.random.normal(nxt(), (n_pos, D), jnp.float32) * std,
        "proj_w": (jax.random.normal(nxt(), (img_dim, prefix_len * D), jnp.float32) * std).astype(bf),
        "proj_b": jnp.zeros((prefix_len * D,), jnp.float32),
        "lnf_g": jnp.ones((D,), jnp.float32),
        "lnf_b": jnp.zeros((D,), jnp.float32),
        "layers": [],
    }
    for _ in range(n_layer):
        layer = {
            "ln1_g": jnp.ones((D,), jnp.float32),
            "ln1_b": jnp.zeros((D,), jnp.float32),
            "attn_w": (jax.random.normal(nxt(), (D, 3 * D), jnp.float32) * std).astype(bf),
            "attn_b": jnp.zeros((3 * D,), jnp.float32),
            "attn_proj_w": (jax.random.normal(nxt(), (D, D), jnp.float32) * std).astype(bf),
            "attn_proj_b": jnp.zeros((D,), jnp.float32),
            "ln2_g": jnp.ones((D,), jnp.float32),
            "ln2_b": jnp.zeros((D,), jnp.float32),
            "mlp_w1": (jax.random.normal(nxt(), (D, 4 * D), jnp.float32) * std).astype(bf),
            "mlp_b1": jnp.zeros((4 * D,), jnp.float32),
            "mlp_w2": (jax.random.normal(nxt(), (4 * D, D), jnp.float32) * std).astype(bf),
            "mlp_b2": jnp.zeros((D,), jnp.float32),
        }
        params["layers"].append(layer)
    return params


# ----------------------------------------------------------------------------
# CheXNetReportDecoder.forward
# ----------------------------------------------------------------------------

def chexnet_report_decoder_forward(params, input_ids, attn_mask, image_embeds,
                                   *, prefix_len, n_head):
    B, S = input_ids.shape
    vocab, D = params["wte"].shape
    H = n_head
    Dh = D // H
    T = prefix_len + S

    # image_embeds = self.image_projection(image_embeds).view(B, prefix_len, D)
    img = fused_linear(image_embeds.astype(jnp.float32),
                       params["proj_w"], params["proj_b"])           # (B, prefix*D)
    img = img.reshape(B, prefix_len, D)

    # token embeddings (gather = glue), concat with image prefix, add wpe
    tok = jnp.take(params["wte"], input_ids, axis=0).astype(jnp.float32)
    x = jnp.concatenate([img, tok], axis=1)                          # (B, T, D)
    x = x + params["wpe"][:T][None, :, :]    # HF GPT-2 adds wpe to all positions

    # prefix_mask = ones; combined causal + key-padding additive bias, shared
    # across heads (iota/compare hoisted out of the attention kernel).
    prefix_mask = jnp.ones((B, prefix_len), dtype=attn_mask.dtype)
    full_mask = jnp.concatenate([prefix_mask, attn_mask], axis=1)    # (B, T)
    causal = jnp.tril(jnp.ones((T, T), dtype=jnp.bool_))
    allowed = jnp.logical_and(causal[None, :, :], full_mask[:, None, :] > 0)
    attn_bias = jnp.where(allowed, 0.0, _MASK_VALUE).astype(jnp.float32)  # (B,T,T) f32

    for lyr in params["layers"]:
        x2d = x.reshape(B * T, D)
        # ---- attention block: ln1 fused into the QKV projection ----
        qkv = fused_linear(x2d, lyr["attn_w"], lyr["attn_b"],
                           ln=(lyr["ln1_g"], lyr["ln1_b"]),
                           out_dtype=jnp.bfloat16)                   # (B*T, 3D) bf16
        qkv = qkv.reshape(B, T, 3, H, Dh).transpose(2, 0, 3, 1, 4)   # one bf16 copy
        o = attention(qkv[0], qkv[1], qkv[2], attn_bias)             # (B,H,T,Dh) bf16
        o = o.transpose(0, 2, 1, 3).reshape(B * T, D)                # bf16
        # output projection with fused bias + residual add
        x = fused_linear(o, lyr["attn_proj_w"], lyr["attn_proj_b"],
                         residual=x2d).reshape(B, T, D)

        # ---- MLP block: ln2 + fc1 + gelu_new + fc2 + residual, one kernel ----
        x = ln_mlp(x.reshape(B * T, D), lyr["ln2_g"], lyr["ln2_b"],
                   lyr["mlp_w1"], lyr["mlp_b1"],
                   lyr["mlp_w2"], lyr["mlp_b2"]).reshape(B, T, D)

    # Slice off the image prefix BEFORE the final LN / lm_head, then use the
    # tied lm_head against the untransposed wte (no .T copy, no bias).
    xs = x[:, prefix_len:, :].reshape(B * S, D)
    logits = fused_linear(xs, params["wte"], None,
                          ln=(params["lnf_g"], params["lnf_b"]),
                          w_transposed=True)                         # (B*S, vocab)
    # equivalent to outputs.logits[:, prefix_len:, :]
    return logits.reshape(B, S, vocab)


# ----------------------------------------------------------------------------
# Driver
# ----------------------------------------------------------------------------

if __name__ == "__main__":
    # small synthetic GPT-2 config
    B, S = 2, 8
    VOCAB = 64
    N_POS = 64
    D_MODEL = 32
    N_HEAD = 2
    N_LAYER = 2
    IMG_DIM = 16
    PREFIX_LEN = 4

    key = jax.random.PRNGKey(0)
    kp, kid, kimg = jax.random.split(key, 3)

    params = init_params(
        kp, vocab=VOCAB, n_pos=N_POS, d_model=D_MODEL, n_head=N_HEAD,
        n_layer=N_LAYER, img_dim=IMG_DIM, prefix_len=PREFIX_LEN,
    )

    input_ids = jax.random.randint(kid, (B, S), 0, VOCAB, dtype=jnp.int32)
    # exercise padding: last two tokens of batch item 1 are masked out
    attn_mask = jnp.ones((B, S), dtype=jnp.int32).at[1, -2:].set(0)
    image_embeds = jax.random.normal(kimg, (B, IMG_DIM), jnp.float32)

    fwd = jax.jit(
        partial(chexnet_report_decoder_forward, prefix_len=PREFIX_LEN, n_head=N_HEAD)
    )
    logits = fwd(params, input_ids, attn_mask, image_embeds)
    logits = jax.block_until_ready(logits)

    assert logits.shape == (B, S, VOCAB), logits.shape
    assert jnp.all(jnp.isfinite(logits))
    # TODO(synk): GPT-2 dropout layers are omitted (module is frozen / eval mode).
    print("KERNEL_OK")
</pallas_src>

<mosaic_0001>
module attributes {stable_mosaic.version = 11 : i64} {
  func.func @kernel(%arg0: i32, %arg1: i32, %arg2: memref<2x16xf32, #tpu.memory_space<vmem>>, %arg3: memref<16x128xbf16, #tpu.memory_space<vmem>>, %arg4: memref<1x128xf32, #tpu.memory_space<vmem>>, %arg5: memref<2x128xf32, #tpu.memory_space<vmem>>) attributes {dimension_semantics = [#tpu.dimension_semantics<parallel>, #tpu.dimension_semantics<parallel>], iteration_bounds = array<i64: 1, 1>, scalar_prefetch = 0 : i64, scratch_operands = 0 : i64, tpu.core_type = #tpu.core_type<tc>, window_params = [{transform_indices = @transform_0, window_bounds = array<i64: 2, 16>}, {transform_indices = @transform_1, window_bounds = array<i64: 16, 128>}, {transform_indices = @transform_2, window_bounds = array<i64: 1, 128>}, {transform_indices = @transform_3, window_bounds = array<i64: 2, 128>}]} {
    %c0 = arith.constant 0 : index
    %c0_0 = arith.constant 0 : index
    %0 = vector.load %arg2[%c0, %c0_0] : memref<2x16xf32, #tpu.memory_space<vmem>>, vector<2x16xf32>
    %1 = arith.truncf %0 : vector<2x16xf32> to vector<2x16xbf16>
    %c0_1 = arith.constant 0 : index
    %c0_2 = arith.constant 0 : index
    %2 = vector.load %arg3[%c0_1, %c0_2] : memref<16x128xbf16, #tpu.memory_space<vmem>>, vector<16x128xbf16>
    %cst = arith.constant dense<0.000000e+00> : vector<2x128xf32>
    %3 = tpu.matmul %1, %2, %cst {dimension_numbers = #tpu.dot_dimension_numbers<[1], [0], [0], [1], [0, 0, 1, 1], [], []>} : vector<2x16xbf16>, vector<16x128xbf16>, vector<2x128xf32> -> vector<2x128xf32>
    %c0_3 = arith.constant 0 : index
    %c0_4 = arith.constant 0 : index
    %4 = vector.load %arg4[%c0_3, %c0_4] : memref<1x128xf32, #tpu.memory_space<vmem>>, vector<1x128xf32>
    %5 = vector.broadcast %4 : vector<1x128xf32> to vector<2x128xf32>
    %6 = arith.addf %3, %5 : vector<2x128xf32>
    %c0_5 = arith.constant 0 : index
    %c0_6 = arith.constant 0 : index
    %7 = vector.load %arg5[%c0_5, %c0_6] : memref<2x128xf32, #tpu.memory_space<vmem>>, vector<2x128xf32>
    tpu.vector_store %arg5[%c0_5, %c0_6], %6 {strides = array<i32>} : memref<2x128xf32, #tpu.memory_space<vmem>>, vector<2x128xf32>,
    return
  }
  func.func @transform_0(%arg0: i32, %arg1: i32) -> (i32, i32) {
    %c0_i32 = arith.constant 0 : i32
    %c0_i32_0 = arith.constant 0 : i32
    return %arg0, %c0_i32 : i32, i32
  }
  func.func @transform_1(%arg0: i32, %arg1: i32) -> (i32, i32) {
    %c0_i32 = arith.constant 0 : i32
    %c0_i32_0 = arith.constant 0 : i32
    return %c0_i32, %arg1 : i32, i32
  }
  func.func @transform_2(%arg0: i32, %arg1: i32) -> (i32, i32) {
    %c0_i32 = arith.constant 0 : i32
    %c0_i32_0 = arith.constant 0 : i32
    return %c0_i32, %arg1 : i32, i32
  }
  func.func @transform_3(%arg0: i32, %arg1: i32) -> (i32, i32) {
    %c0_i32 = arith.constant 0 : i32
    return %arg0, %arg1 : i32, i32
  }
}

module attributes {stable_mosaic.version = 11 : i64} {
  func.func @kernel(%arg0: i32, %arg1: i32, %arg2: memref<24x32xf32, #tpu.memory_space<vmem>>, %arg3: memref<32x96xbf16, #tpu.memory_space<vmem>>, %arg4: memref<1x32xf32, #tpu.memory_space<vmem>>, %arg5: memref<1x32xf32, #tpu.memory_space<vmem>>, %arg6: memref<1x96xf32, #tpu.memory_space<vmem>>, %arg7: memref<24x96xbf16, #tpu.memory_space<vmem>>) attributes {dimension_semantics = [#tpu.dimension_semantics<parallel>, #tpu.dimension_semantics<parallel>], iteration_bounds = array<i64: 1, 1>, scalar_prefetch = 0 : i64, scratch_operands = 0 : i64, tpu.core_type = #tpu.core_type<tc>, window_params = [{transform_indices = @transform_0, window_bounds = array<i64: 24, 32>}, {transform_indices = @transform_1, window_bounds = array<i64: 32, 96>}, {pipeline_mode = #tpu.pipeline_mode<synchronous>, transform_indices = @transform_2, window_bounds = array<i64: 1, 32>}, {pipeline_mode = #tpu.pipeline_mode<synchronous>, transform_indices = @transform_3, window_bounds = array<i64: 1, 32>}, {transform_indices = @transform_4, window_bounds = array<i64: 1, 96>}, {transform_indices = @transform_5, window_bounds = array<i64: 24, 96>}]} {
    %c0 = arith.constant 0 : index
    %c0_0 = arith.constant 0 : index
    %0 = vector.load %arg2[%c0, %c0_0] : memref<24x32xf32, #tpu.memory_space<vmem>>, vector<24x32xf32>
    %cst = arith.constant dense<0.000000e+00> : vector<24xf32>
    %1 = vector.multi_reduction <add>, %0, %cst [1] : vector<24x32xf32> to vector<24xf32>
    %2 = vector.shape_cast %1 : vector<24xf32> to vector<24x1xf32>
    %cst_1 = arith.constant 3.200000e+01 : f32
    %3 = vector.broadcast %cst_1 : f32 to vector<24x1xf32>
    %4 = arith.divf %2, %3 : vector<24x1xf32>
    %5 = vector.broadcast %4 : vector<24x1xf32> to vector<24x32xf32>
    %6 = arith.subf %0, %5 : vector<24x32xf32>
    %7 = arith.mulf %6, %6 : vector<24x32xf32>
    %cst_2 = arith.constant dense<0.000000e+00> : vector<24xf32>
    %8 = vector.multi_reduction <add>, %7, %cst_2 [1] : vector<24x32xf32> to vector<24xf32>
    %9 = vector.shape_cast %8 : vector<24xf32> to vector<24x1xf32>
    %cst_3 = arith.constant 3.200000e+01 : f32
    %10 = vector.broadcast %cst_3 : f32 to vector<24x1xf32>
    %11 = arith.divf %9, %10 : vector<24x1xf32>
    %12 = vector.broadcast %4 : vector<24x1xf32> to vector<24x32xf32>
    %13 = arith.subf %0, %12 : vector<24x32xf32>
    %cst_4 = arith.constant 9.99999974E-6 : f32
    %14 = vector.broadcast %cst_4 : f32 to vector<24x1xf32>
    %15 = arith.addf %11, %14 : vector<24x1xf32>
    %16 = math.rsqrt %15 : vector<24x1xf32>
    %17 = vector.broadcast %16 : vector<24x1xf32> to vector<24x32xf32>
    %18 = arith.mulf %13, %17 : vector<24x32xf32>
    %c0_5 = arith.constant 0 : index
    %c0_6 = arith.constant 0 : index
    %19 = vector.load %arg4[%c0_5, %c0_6] : memref<1x32xf32, #tpu.memory_space<vmem>>, vector<1x32xf32>
    %20 = vector.broadcast %19 : vector<1x32xf32> to vector<24x32xf32>
    %21 = arith.mulf %18, %20 : vector<24x32xf32>
    %c0_7 = arith.constant 0 : index
    %c0_8 = arith.constant 0 : index
    %22 = vector.load %arg5[%c0_7, %c0_8] : memref<1x32xf32, #tpu.memory_space<vmem>>, vector<1x32xf32>
    %23 = vector.broadcast %22 : vector<1x32xf32> to vector<24x32xf32>
    %24 = arith.addf %21, %23 : vector<24x32xf32>
    %25 = arith.truncf %24 : vector<24x32xf32> to vector<24x32xbf16>
    %c0_9 = arith.constant 0 : index
    %c0_10 = arith.constant 0 : index
    %26 = vector.load %arg3[%c0_9, %c0_10] : memref<32x96xbf16, #tpu.memory_space<vmem>>, vector<32x96xbf16>
    %cst_11 = arith.constant dense<0.000000e+00> : vector<24x96xf32>
    %27 = tpu.matmul %25, %26, %cst_11 {dimension_numbers = #tpu.dot_dimension_numbers<[1], [0], [0], [1], [0, 0, 1, 1], [], []>} : vector<24x32xbf16>, vector<32x96xbf16>, vector<24x96xf32> -> vector<24x96xf32>
    %c0_12 = arith.constant 0 : index
    %c0_13 = arith.constant 0 : index
    %28 = vector.load %arg6[%c0_12, %c0_13] : memref<1x96xf32, #tpu.memory_space<vmem>>, vector<1x96xf32>
    %29 = vector.broadcast %28 : vector<1x96xf32> to vector<24x96xf32>
    %30 = arith.addf %27, %29 : vector<24x96xf32>
    %31 = arith.truncf %30 : vector<24x96xf32> to vector<24x96xbf16>
    %c0_14 = arith.constant 0 : index
    %c0_15 = arith.constant 0 : index
    %32 = vector.load %arg7[%c0_14, %c0_15] : memref<24x96xbf16, #tpu.memory_space<vmem>>, vector<24x96xbf16>
    tpu.vector_store %arg7[%c0_14, %c0_15], %31 {strides = array<i32>} : memref<24x96xbf16, #tpu.memory_space<vmem>>, vector<24x96xbf16>,
    return
  }
  func.func @transform_0(%arg0: i32, %arg1: i32) -> (i32, i32) {
    %c0_i32 = arith.constant 0 : i32
    %c0_i32_0 = arith.constant 0 : i32
    return %arg0, %c0_i32 : i32, i32
  }
  func.func @transform_1(%arg0: i32, %arg1: i32) -> (i32, i32) {
    %c0_i32 = arith.constant 0 : i32
    %c0_i32_0 = arith.constant 0 : i32
    return %c0_i32, %arg1 : i32, i32
  }
  func.func @transform_2(%arg0: i32, %arg1: i32) -> (i32, i32) {
    %c0_i32 = arith.constant 0 : i32
    %c0_i32_0 = arith.constant 0 : i32
    %c0_i32_1 = arith.constant 0 : i32
    return %c0_i32, %c0_i32_0 : i32, i32
  }
  func.func @transform_3(%arg0: i32, %arg1: i32) -> (i32, i32) {
    %c0_i32 = arith.constant 0 : i32
    %c0_i32_0 = arith.constant 0 : i32
    %c0_i32_1 = arith.constant 0 : i32
    return %c0_i32, %c0_i32_0 : i32, i32
  }
  func.func @transform_4(%arg0: i32, %arg1: i32) -> (i32, i32) {
    %c0_i32 = arith.constant 0 : i32
    %c0_i32_0 = arith.constant 0 : i32
    return %c0_i32, %arg1 : i32, i32
  }
  func.func @transform_5(%arg0: i32, %arg1: i32) -> (i32, i32) {
    %c0_i32 = arith.constant 0 : i32
    return %arg0, %arg1 : i32, i32
  }
}

module attributes {stable_mosaic.version = 11 : i64} {
  func.func @_attn_kernel(%arg0: i32, %arg1: i32, %arg2: i32, %arg3: memref<1x1x12x16xbf16, #tpu.memory_space<vmem>>, %arg4: memref<1x1x12x16xbf16, #tpu.memory_space<vmem>>, %arg5: memref<1x1x12x16xbf16, #tpu.memory_space<vmem>>, %arg6: memref<1x12x12xf32, #tpu.memory_space<vmem>>, %arg7: memref<1x1x12x16xbf16, #tpu.memory_space<vmem>>, %arg8: memref<12x1xf32, #tpu.memory_space<vmem>>, %arg9: memref<12x1xf32, #tpu.memory_space<vmem>>, %arg10: memref<12x16xf32, #tpu.memory_space<vmem>>) attributes {dimension_semantics = [#tpu.dimension_semantics<parallel>, #tpu.dimension_semantics<parallel>, #tpu.dimension_semantics<arbitrary>], iteration_bounds = array<i64: 2, 2, 1>, scalar_prefetch = 0 : i64, scratch_operands = 3 : i64, tpu.core_type = #tpu.core_type<tc>, window_params = [{transform_indices = @transform_0, window_bounds = array<i64: 1, 1, 12, 16>}, {transform_indices = @transform_1, window_bounds = array<i64: 1, 1, 12, 16>}, {transform_indices = @transform_2, window_bounds = array<i64: 1, 1, 12, 16>}, {transform_indices = @transform_3, window_bounds = array<i64: 1, 12, 12>}, {transform_indices = @transform_4, window_bounds = array<i64: 1, 1, 12, 16>}]} {
    %c0_i32 = arith.constant 0 : i32
    %0 = arith.cmpi eq, %arg2, %c0_i32 : i32
    %1 = arith.extui %0 : i1 to i32
    %c0_i32_0 = arith.constant 0 : i32
    %2 = arith.cmpi ne, %1, %c0_i32_0 : i32
    scf.if %2 {
      %cst_33 = arith.constant 0xFF800000 : f32
      %42 = vector.broadcast %cst_33 : f32 to vector<12x1xf32>
      %c0_34 = arith.constant 0 : index
      %c0_35 = arith.constant 0 : index
      %43 = vector.load %arg8[%c0_34, %c0_35] : memref<12x1xf32, #tpu.memory_space<vmem>>, vector<12x1xf32>
      tpu.vector_store %arg8[%c0_34, %c0_35], %42 {strides = array<i32>} : memref<12x1xf32, #tpu.memory_space<vmem>>, vector<12x1xf32>,
      %cst_36 = arith.constant 0.000000e+00 : f32
      %44 = vector.broadcast %cst_36 : f32 to vector<12x1xf32>
      %c0_37 = arith.constant 0 : index
      %c0_38 = arith.constant 0 : index
      %45 = vector.load %arg9[%c0_37, %c0_38] : memref<12x1xf32, #tpu.memory_space<vmem>>, vector<12x1xf32>
      tpu.vector_store %arg9[%c0_37, %c0_38], %44 {strides = array<i32>} : memref<12x1xf32, #tpu.memory_space<vmem>>, vector<12x1xf32>,
      %cst_39 = arith.constant 0.000000e+00 : f32
      %46 = vector.broadcast %cst_39 : f32 to vector<12x16xf32>
      %c0_40 = arith.constant 0 : index
      %c0_41 = arith.constant 0 : index
      %47 = vector.load %arg10[%c0_40, %c0_41] : memref<12x16xf32, #tpu.memory_space<vmem>>, vector<12x16xf32>
      tpu.vector_store %arg10[%c0_40, %c0_41], %46 {strides = array<i32>} : memref<12x16xf32, #tpu.memory_space<vmem>>, vector<12x16xf32>,
    } else {
    }
    %c0 = arith.constant 0 : index
    %c0_1 = arith.constant 0 : index
    %c0_2 = arith.constant 0 : index
    %c0_3 = arith.constant 0 : index
    %3 = vector.load %arg3[%c0, %c0_1, %c0_2, %c0_3] : memref<1x1x12x16xbf16, #tpu.memory_space<vmem>>, vector<1x1x12x16xbf16>
    %4 = vector.shape_cast %3 : vector<1x1x12x16xbf16> to vector<12x16xbf16>
    %c0_4 = arith.constant 0 : index
    %c0_5 = arith.constant 0 : index
    %c0_6 = arith.constant 0 : index
    %c0_7 = arith.constant 0 : index
    %5 = vector.load %arg4[%c0_4, %c0_5, %c0_6, %c0_7] : memref<1x1x12x16xbf16, #tpu.memory_space<vmem>>, vector<1x1x12x16xbf16>
    %6 = vector.shape_cast %5 : vector<1x1x12x16xbf16> to vector<12x16xbf16>
    %c0_8 = arith.constant 0 : index
    %c0_9 = arith.constant 0 : index
    %c0_10 = arith.constant 0 : index
    %c0_11 = arith.constant 0 : index
    %7 = vector.load %arg5[%c0_8, %c0_9, %c0_10, %c0_11] : memref<1x1x12x16xbf16, #tpu.memory_space<vmem>>, vector<1x1x12x16xbf16>
    %8 = vector.shape_cast %7 : vector<1x1x12x16xbf16> to vector<12x16xbf16>
    %c0_12 = arith.constant 0 : index
    %c0_13 = arith.constant 0 : index
    %c0_14 = arith.constant 0 : index
    %9 = vector.load %arg6[%c0_12, %c0_13, %c0_14] : memref<1x12x12xf32, #tpu.memory_space<vmem>>, vector<1x12x12xf32>
    %10 = vector.shape_cast %9 : vector<1x12x12xf32> to vector<12x12xf32>
    %11 = tpu.transpose %6, [1, 0] : vector<12x16xbf16> -> vector<16x12xbf16>
    %cst = arith.constant dense<0.000000e+00> : vector<12x12xf32>
    %12 = tpu.matmul %4, %11, %cst {dimension_numbers = #tpu.dot_dimension_numbers<[1], [0], [0], [1], [0, 0, 1, 1], [], []>} : vector<12x16xbf16>, vector<16x12xbf16>, vector<12x12xf32> -> vector<12x12xf32>
    %cst_15 = arith.constant 2.500000e-01 : f32
    %13 = vector.broadcast %cst_15 : f32 to vector<12x12xf32>
    %14 = arith.mulf %12, %13 : vector<12x12xf32>
    %15 = arith.addf %14, %10 : vector<12x12xf32>
    %c0_16 = arith.constant 0 : index
    %c0_17 = arith.constant 0 : index
    %16 = vector.load %arg8[%c0_16, %c0_17] : memref<12x1xf32, #tpu.memory_space<vmem>>, vector<12x1xf32>
    %cst_18 = arith.constant dense<0xFF800000> : vector<12xf32>
    %17 = vector.multi_reduction <maximumf>, %15, %cst_18 [1] : vector<12x12xf32> to vector<12xf32>
    %18 = vector.shape_cast %17 : vector<12xf32> to vector<12x1xf32>
    %19 = arith.maximumf %16, %18 : vector<12x1xf32>
    %20 = arith.subf %16, %19 : vector<12x1xf32>
    %21 = math.exp %20 : vector<12x1xf32>
    %22 = vector.broadcast %19 : vector<12x1xf32> to vector<12x12xf32>
    %23 = arith.subf %15, %22 : vector<12x12xf32>
    %24 = math.exp %23 : vector<12x12xf32>
    %c0_19 = arith.constant 0 : index
    %c0_20 = arith.constant 0 : index
    %25 = vector.load %arg9[%c0_19, %c0_20] : memref<12x1xf32, #tpu.memory_space<vmem>>, vector<12x1xf32>
    %26 = arith.mulf %21, %25 : vector<12x1xf32>
    %cst_21 = arith.constant dense<0.000000e+00> : vector<12xf32>
    %27 = vector.multi_reduction <add>, %24, %cst_21 [1] : vector<12x12xf32> to vector<12xf32>
    %28 = vector.shape_cast %27 : vector<12xf32> to vector<12x1xf32>
    %29 = arith.addf %26, %28 : vector<12x1xf32>
    %c0_22 = arith.constant 0 : index
    %c0_23 = arith.constant 0 : index
    %30 = vector.load %arg9[%c0_22, %c0_23] : memref<12x1xf32, #tpu.memory_space<vmem>>, vector<12x1xf32>
    tpu.vector_store %arg9[%c0_22, %c0_23], %29 {strides = array<i32>} : memref<12x1xf32, #tpu.memory_space<vmem>>, vector<12x1xf32>,
    %c0_24 = arith.constant 0 : index
    %c0_25 = arith.constant 0 : index
    %31 = vector.load %arg10[%c0_24, %c0_25] : memref<12x16xf32, #tpu.memory_space<vmem>>, vector<12x16xf32>
    %32 = vector.broadcast %21 : vector<12x1xf32> to vector<12x16xf32>
    %33 = arith.mulf %32, %31 : vector<12x16xf32>
    %34 = arith.truncf %24 : vector<12x12xf32> to vector<12x12xbf16>
    %cst_26 = arith.constant dense<0.000000e+00> : vector<12x16xf32>
    %35 = tpu.matmul %34, %8, %cst_26 {dimension_numbers = #tpu.dot_dimension_numbers<[1], [0], [0], [1], [0, 0, 1, 1], [], []>} : vector<12x12xbf16>, vector<12x16xbf16>, vector<12x16xf32> -> vector<12x16xf32>
    %36 = arith.addf %33, %35 : vector<12x16xf32>
    %c0_27 = arith.constant 0 : index
    %c0_28 = arith.constant 0 : index
    %37 = vector.load %arg10[%c0_27, %c0_28] : memref<12x16xf32, #tpu.memory_space<vmem>>, vector<12x16xf32>
    tpu.vector_store %arg10[%c0_27, %c0_28], %36 {strides = array<i32>} : memref<12x16xf32, #tpu.memory_space<vmem>>, vector<12x16xf32>,
    %c0_29 = arith.constant 0 : index
    %c0_30 = arith.constant 0 : index
    %38 = vector.load %arg8[%c0_29, %c0_30] : memref<12x1xf32, #tpu.memory_space<vmem>>, vector<12x1xf32>
    tpu.vector_store %arg8[%c0_29, %c0_30], %19 {strides = array<i32>} : memref<12x1xf32, #tpu.memory_space<vmem>>, vector<12x1xf32>,
    %c0_i32_31 = arith.constant 0 : i32
    %39 = arith.cmpi eq, %arg2, %c0_i32_31 : i32
    %40 = arith.extui %39 : i1 to i32
    %c0_i32_32 = arith.constant 0 : i32
    %41 = arith.cmpi ne, %40, %c0_i32_32 : i32
    scf.if %41 {
      %c0_33 = arith.constant 0 : index
      %c0_34 = arith.constant 0 : index
      %42 = vector.load %arg10[%c0_33, %c0_34] : memref<12x16xf32, #tpu.memory_space<vmem>>, vector<12x16xf32>
      %c0_35 = arith.constant 0 : index
      %c0_36 = arith.constant 0 : index
      %43 = vector.load %arg9[%c0_35, %c0_36] : memref<12x1xf32, #tpu.memory_space<vmem>>, vector<12x1xf32>
      %44 = tpu.reciprocal %43 {approx = true} : vector<12x1xf32> -> vector<12x1xf32>
      %45 = vector.broadcast %44 : vector<12x1xf32> to vector<12x16xf32>
      %46 = arith.mulf %42, %45 : vector<12x16xf32>
      %47 = arith.truncf %46 : vector<12x16xf32> to vector<12x16xbf16>
      %c0_37 = arith.constant 0 : index
      %c0_38 = arith.constant 0 : index
      %c0_39 = arith.constant 0 : index
      %c0_40 = arith.constant 0 : index
      %48 = vector.load %arg7[%c0_37, %c0_38, %c0_39, %c0_40] : memref<1x1x12x16xbf16, #tpu.memory_space<vmem>>, vector<1x1x12x16xbf16>
      %49 = vector.shape_cast %48 : vector<1x1x12x16xbf16> to vector<12x16xbf16>
      %50 = vector.shape_cast %47 : vector<12x16xbf16> to vector<1x1x12x16xbf16>
      tpu.vector_store %arg7[%c0_37, %c0_38, %c0_39, %c0_40], %50 {strides = array<i32>} : memref<1x1x12x16xbf16, #tpu.memory_space<vmem>>, vector<1x1x12x16xbf16>,
    } else {
    }
    return
  }
  func.func @transform_0(%arg0: i32, %arg1: i32, %arg2: i32) -> (i32, i32, i32, i32) {
    %c0_i32 = arith.constant 0 : i32
    %c0_i32_0 = arith.constant 0 : i32
    %c0_i32_1 = arith.constant 0 : i32
    return %arg0, %arg1, %c0_i32, %c0_i32_0 : i32, i32, i32, i32
  }
  func.func @transform_1(%arg0: i32, %arg1: i32, %arg2: i32) -> (i32, i32, i32, i32) {
    %c0_i32 = arith.constant 0 : i32
    %c0_i32_0 = arith.constant 0 : i32
    return %arg0, %arg1, %arg2, %c0_i32 : i32, i32, i32, i32
  }
  func.func @transform_2(%arg0: i32, %arg1: i32, %arg2: i32) -> (i32, i32, i32, i32) {
    %c0_i32 = arith.constant 0 : i32
    %c0_i32_0 = arith.constant 0 : i32
    return %arg0, %arg1, %arg2, %c0_i32 : i32, i32, i32, i32
  }
  func.func @transform_3(%arg0: i32, %arg1: i32, %arg2: i32) -> (i32, i32, i32) {
    %c0_i32 = arith.constant 0 : i32
    %c0_i32_0 = arith.constant 0 : i32
    return %arg0, %c0_i32, %arg2 : i32, i32, i32
  }
  func.func @transform_4(%arg0: i32, %arg1: i32, %arg2: i32) -> (i32, i32, i32, i32) {
    %c0_i32 = arith.constant 0 : i32
    %c0_i32_0 = arith.constant 0 : i32
    %c0_i32_1 = arith.constant 0 : i32
    return %arg0, %arg1, %c0_i32, %c0_i32_0 : i32, i32, i32, i32
  }
}

module attributes {stable_mosaic.version = 11 : i64} {
  func.func @kernel(%arg0: i32, %arg1: i32, %arg2: memref<24x32xbf16, #tpu.memory_space<vmem>>, %arg3: memref<32x32xbf16, #tpu.memory_space<vmem>>, %arg4: memref<1x32xf32, #tpu.memory_space<vmem>>, %arg5: memref<24x32xf32, #tpu.memory_space<vmem>>, %arg6: memref<24x32xf32, #tpu.memory_space<vmem>>) attributes {dimension_semantics = [#tpu.dimension_semantics<parallel>, #tpu.dimension_semantics<parallel>], iteration_bounds = array<i64: 1, 1>, scalar_prefetch = 0 : i64, scratch_operands = 0 : i64, tpu.core_type = #tpu.core_type<tc>, window_params = [{transform_indices = @transform_0, window_bounds = array<i64: 24, 32>}, {transform_indices = @transform_1, window_bounds = array<i64: 32, 32>}, {transform_indices = @transform_2, window_bounds = array<i64: 1, 32>}, {transform_indices = @transform_3, window_bounds = array<i64: 24, 32>}, {transform_indices = @transform_4, window_bounds = array<i64: 24, 32>}]} {
    %c0 = arith.constant 0 : index
    %c0_0 = arith.constant 0 : index
    %0 = vector.load %arg2[%c0, %c0_0] : memref<24x32xbf16, #tpu.memory_space<vmem>>, vector<24x32xbf16>
    %c0_1 = arith.constant 0 : index
    %c0_2 = arith.constant 0 : index
    %1 = vector.load %arg3[%c0_1, %c0_2] : memref<32x32xbf16, #tpu.memory_space<vmem>>, vector<32x32xbf16>
    %cst = arith.constant dense<0.000000e+00> : vector<24x32xf32>
    %2 = tpu.matmul %0, %1, %cst {dimension_numbers = #tpu.dot_dimension_numbers<[1], [0], [0], [1], [0, 0, 1, 1], [], []>} : vector<24x32xbf16>, vector<32x32xbf16>, vector<24x32xf32> -> vector<24x32xf32>
    %c0_3 = arith.constant 0 : index
    %c0_4 = arith.constant 0 : index
    %3 = vector.load %arg4[%c0_3, %c0_4] : memref<1x32xf32, #tpu.memory_space<vmem>>, vector<1x32xf32>
    %4 = vector.broadcast %3 : vector<1x32xf32> to vector<24x32xf32>
    %5 = arith.addf %2, %4 : vector<24x32xf32>
    %c0_5 = arith.constant 0 : index
    %c0_6 = arith.constant 0 : index
    %6 = vector.load %arg5[%c0_5, %c0_6] : memref<24x32xf32, #tpu.memory_space<vmem>>, vector<24x32xf32>
    %7 = arith.addf %5, %6 : vector<24x32xf32>
    %c0_7 = arith.constant 0 : index
    %c0_8 = arith.constant 0 : index
    %8 = vector.load %arg6[%c0_7, %c0_8] : memref<24x32xf32, #tpu.memory_space<vmem>>, vector<24x32xf32>
    tpu.vector_store %arg6[%c0_7, %c0_8], %7 {strides = array<i32>} : memref<24x32xf32, #tpu.memory_space<vmem>>, vector<24x32xf32>,
    return
  }
  func.func @transform_0(%arg0: i32, %arg1: i32) -> (i32, i32) {
    %c0_i32 = arith.constant 0 : i32
    %c0_i32_0 = arith.constant 0 : i32
    return %arg0, %c0_i32 : i32, i32
  }
  func.func @transform_1(%arg0: i32, %arg1: i32) -> (i32, i32) {
    %c0_i32 = arith.constant 0 : i32
    %c0_i32_0 = arith.constant 0 : i32
    return %c0_i32, %arg1 : i32, i32
  }
  func.func @transform_2(%arg0: i32, %arg1: i32) -> (i32, i32) {
    %c0_i32 = arith.constant 0 : i32
    %c0_i32_0 = arith.constant 0 : i32
    return %c0_i32, %arg1 : i32, i32
  }
  func.func @transform_3(%arg0: i32, %arg1: i32) -> (i32, i32) {
    %c0_i32 = arith.constant 0 : i32
    return %arg0, %arg1 : i32, i32
  }
  func.func @transform_4(%arg0: i32, %arg1: i32) -> (i32, i32) {
    %c0_i32 = arith.constant 0 : i32
    return %arg0, %arg1 : i32, i32
  }
}

module attributes {stable_mosaic.version = 11 : i64} {
  func.func @_ln_mlp_kernel(%arg0: i32, %arg1: i32, %arg2: memref<24x32xf32, #tpu.memory_space<vmem>>, %arg3: memref<1x32xf32, #tpu.memory_space<vmem>>, %arg4: memref<1x32xf32, #tpu.memory_space<vmem>>, %arg5: memref<32x128xbf16, #tpu.memory_space<vmem>>, %arg6: memref<1x128xf32, #tpu.memory_space<vmem>>, %arg7: memref<128x32xbf16, #tpu.memory_space<vmem>>, %arg8: memref<1x32xf32, #tpu.memory_space<vmem>>, %arg9: memref<24x32xf32, #tpu.memory_space<vmem>>, %arg10: memref<24x32xf32, #tpu.memory_space<vmem>>, %arg11: memref<24x32xbf16, #tpu.memory_space<vmem>>) attributes {dimension_semantics = [#tpu.dimension_semantics<parallel>, #tpu.dimension_semantics<arbitrary>], iteration_bounds = array<i64: 1, 1>, scalar_prefetch = 0 : i64, scratch_operands = 2 : i64, tpu.core_type = #tpu.core_type<tc>, window_params = [{transform_indices = @transform_0, window_bounds = array<i64: 24, 32>}, {pipeline_mode = #tpu.pipeline_mode<synchronous>, transform_indices = @transform_1, window_bounds = array<i64: 1, 32>}, {pipeline_mode = #tpu.pipeline_mode<synchronous>, transform_indices = @transform_2, window_bounds = array<i64: 1, 32>}, {transform_indices = @transform_3, window_bounds = array<i64: 32, 128>}, {transform_indices = @transform_4, window_bounds = array<i64: 1, 128>}, {transform_indices = @transform_5, window_bounds = array<i64: 128, 32>}, {pipeline_mode = #tpu.pipeline_mode<synchronous>, transform_indices = @transform_6, window_bounds = array<i64: 1, 32>}, {transform_indices = @transform_7, window_bounds = array<i64: 24, 32>}]} {
    %c0_i32 = arith.constant 0 : i32
    %0 = arith.cmpi eq, %arg1, %c0_i32 : i32
    %1 = arith.extui %0 : i1 to i32
    %c0_i32_0 = arith.constant 0 : i32
    %2 = arith.cmpi ne, %1, %c0_i32_0 : i32
    scf.if %2 {
      %c0_19 = arith.constant 0 : index
      %c0_20 = arith.constant 0 : index
      %31 = vector.load %arg2[%c0_19, %c0_20] : memref<24x32xf32, #tpu.memory_space<vmem>>, vector<24x32xf32>
      %cst_21 = arith.constant dense<0.000000e+00> : vector<24xf32>
      %32 = vector.multi_reduction <add>, %31, %cst_21 [1] : vector<24x32xf32> to vector<24xf32>
      %33 = vector.shape_cast %32 : vector<24xf32> to vector<24x1xf32>
      %cst_22 = arith.constant 3.200000e+01 : f32
      %34 = vector.broadcast %cst_22 : f32 to vector<24x1xf32>
      %35 = arith.divf %33, %34 : vector<24x1xf32>
      %36 = vector.broadcast %35 : vector<24x1xf32> to vector<24x32xf32>
      %37 = arith.subf %31, %36 : vector<24x32xf32>
      %38 = arith.mulf %37, %37 : vector<24x32xf32>
      %cst_23 = arith.constant dense<0.000000e+00> : vector<24xf32>
      %39 = vector.multi_reduction <add>, %38, %cst_23 [1] : vector<24x32xf32> to vector<24xf32>
      %40 = vector.shape_cast %39 : vector<24xf32> to vector<24x1xf32>
      %cst_24 = arith.constant 3.200000e+01 : f32
      %41 = vector.broadcast %cst_24 : f32 to vector<24x1xf32>
      %42 = arith.divf %40, %41 : vector<24x1xf32>
      %43 = vector.broadcast %35 : vector<24x1xf32> to vector<24x32xf32>
      %44 = arith.subf %31, %43 : vector<24x32xf32>
      %cst_25 = arith.constant 9.99999974E-6 : f32
      %45 = vector.broadcast %cst_25 : f32 to vector<24x1xf32>
      %46 = arith.addf %42, %45 : vector<24x1xf32>
      %47 = math.rsqrt %46 : vector<24x1xf32>
      %48 = vector.broadcast %47 : vector<24x1xf32> to vector<24x32xf32>
      %49 = arith.mulf %44, %48 : vector<24x32xf32>
      %c0_26 = arith.constant 0 : index
      %c0_27 = arith.constant 0 : index
      %50 = vector.load %arg3[%c0_26, %c0_27] : memref<1x32xf32, #tpu.memory_space<vmem>>, vector<1x32xf32>
      %51 = vector.broadcast %50 : vector<1x32xf32> to vector<24x32xf32>
      %52 = arith.mulf %49, %51 : vector<24x32xf32>
      %c0_28 = arith.constant 0 : index
      %c0_29 = arith.constant 0 : index
      %53 = vector.load %arg4[%c0_28, %c0_29] : memref<1x32xf32, #tpu.memory_space<vmem>>, vector<1x32xf32>
      %54 = vector.broadcast %53 : vector<1x32xf32> to vector<24x32xf32>
      %55 = arith.addf %52, %54 : vector<24x32xf32>
      %56 = arith.truncf %55 : vector<24x32xf32> to vector<24x32xbf16>
      %c0_30 = arith.constant 0 : index
      %c0_31 = arith.constant 0 : index
      %57 = vector.load %arg11[%c0_30, %c0_31] : memref<24x32xbf16, #tpu.memory_space<vmem>>, vector<24x32xbf16>
      tpu.vector_store %arg11[%c0_30, %c0_31], %56 {strides = array<i32>} : memref<24x32xbf16, #tpu.memory_space<vmem>>, vector<24x32xbf16>,
      %cst_32 = arith.constant 0.000000e+00 : f32
      %58 = vector.broadcast %cst_32 : f32 to vector<24x32xf32>
      %c0_33 = arith.constant 0 : index
      %c0_34 = arith.constant 0 : index
      %59 = vector.load %arg10[%c0_33, %c0_34] : memref<24x32xf32, #tpu.memory_space<vmem>>, vector<24x32xf32>
      tpu.vector_store %arg10[%c0_33, %c0_34], %58 {strides = array<i32>} : memref<24x32xf32, #tpu.memory_space<vmem>>, vector<24x32xf32>,
    } else {
    }
    %c0 = arith.constant 0 : index
    %c0_1 = arith.constant 0 : index
    %3 = vector.load %arg11[%c0, %c0_1] : memref<24x32xbf16, #tpu.memory_space<vmem>>, vector<24x32xbf16>
    %c0_2 = arith.constant 0 : index
    %c0_3 = arith.constant 0 : index
    %4 = vector.load %arg5[%c0_2, %c0_3] : memref<32x128xbf16, #tpu.memory_space<vmem>>, vector<32x128xbf16>
    %cst = arith.constant dense<0.000000e+00> : vector<24x128xf32>
    %5 = tpu.matmul %3, %4, %cst {dimension_numbers = #tpu.dot_dimension_numbers<[1], [0], [0], [1], [0, 0, 1, 1], [], []>} : vector<24x32xbf16>, vector<32x128xbf16>, vector<24x128xf32> -> vector<24x128xf32>
    %c0_4 = arith.constant 0 : index
    %c0_5 = arith.constant 0 : index
    %6 = vector.load %arg6[%c0_4, %c0_5] : memref<1x128xf32, #tpu.memory_space<vmem>>, vector<1x128xf32>
    %7 = vector.broadcast %6 : vector<1x128xf32> to vector<24x128xf32>
    %8 = arith.addf %5, %7 : vector<24x128xf32>
    %cst_6 = arith.constant 5.000000e-01 : f32
    %9 = vector.broadcast %cst_6 : f32 to vector<24x128xf32>
    %10 = arith.mulf %9, %8 : vector<24x128xf32>
    %cst_7 = arith.constant 4.471500e-02 : f32
    %11 = vector.broadcast %cst_7 : f32 to vector<24x128xf32>
    %12 = arith.mulf %11, %8 : vector<24x128xf32>
    %13 = arith.mulf %12, %8 : vector<24x128xf32>
    %14 = arith.mulf %13, %8 : vector<24x128xf32>
    %15 = arith.addf %8, %14 : vector<24x128xf32>
    %cst_8 = arith.constant 0.797884583 : f32
    %16 = vector.broadcast %cst_8 : f32 to vector<24x128xf32>
    %17 = arith.mulf %16, %15 : vector<24x128xf32>
    %18 = math.tanh %17 : vector<24x128xf32>
    %cst_9 = arith.constant 1.000000e+00 : f32
    %19 = vector.broadcast %cst_9 : f32 to vector<24x128xf32>
    %20 = arith.addf %19, %18 : vector<24x128xf32>
    %21 = arith.mulf %10, %20 : vector<24x128xf32>
    %c0_10 = arith.constant 0 : index
    %c0_11 = arith.constant 0 : index
    %22 = vector.load %arg10[%c0_10, %c0_11] : memref<24x32xf32, #tpu.memory_space<vmem>>, vector<24x32xf32>
    %23 = arith.truncf %21 : vector<24x128xf32> to vector<24x128xbf16>
    %c0_12 = arith.constant 0 : index
    %c0_13 = arith.constant 0 : index
    %24 = vector.load %arg7[%c0_12, %c0_13] : memref<128x32xbf16, #tpu.memory_space<vmem>>, vector<128x32xbf16>
    %cst_14 = arith.constant dense<0.000000e+00> : vector<24x32xf32>
    %25 = tpu.matmul %23, %24, %cst_14 {dimension_numbers = #tpu.dot_dimension_numbers<[1], [0], [0], [1], [0, 0, 1, 1], [], []>} : vector<24x128xbf16>, vector<128x32xbf16>, vector<24x32xf32> -> vector<24x32xf32>
    %26 = arith.addf %22, %25 : vector<24x32xf32>
    %c0_15 = arith.constant 0 : index
    %c0_16 = arith.constant 0 : index
    %27 = vector.load %arg10[%c0_15, %c0_16] : memref<24x32xf32, #tpu.memory_space<vmem>>, vector<24x32xf32>
    tpu.vector_store %arg10[%c0_15, %c0_16], %26 {strides = array<i32>} : memref<24x32xf32, #tpu.memory_space<vmem>>, vector<24x32xf32>,
    %c0_i32_17 = arith.constant 0 : i32
    %28 = arith.cmpi eq, %arg1, %c0_i32_17 : i32
    %29 = arith.extui %28 : i1 to i32
    %c0_i32_18 = arith.constant 0 : i32
    %30 = arith.cmpi ne, %29, %c0_i32_18 : i32
    scf.if %30 {
      %c0_19 = arith.constant 0 : index
      %c0_20 = arith.constant 0 : index
      %31 = vector.load %arg10[%c0_19, %c0_20] : memref<24x32xf32, #tpu.memory_space<vmem>>, vector<24x32xf32>
      %c0_21 = arith.constant 0 : index
      %c0_22 = arith.constant 0 : index
      %32 = vector.load %arg8[%c0_21, %c0_22] : memref<1x32xf32, #tpu.memory_space<vmem>>, vector<1x32xf32>
      %33 = vector.broadcast %32 : vector<1x32xf32> to vector<24x32xf32>
      %34 = arith.addf %31, %33 : vector<24x32xf32>
      %c0_23 = arith.constant 0 : index
      %c0_24 = arith.constant 0 : index
      %35 = vector.load %arg2[%c0_23, %c0_24] : memref<24x32xf32, #tpu.memory_space<vmem>>, vector<24x32xf32>
      %36 = arith.addf %34, %35 : vector<24x32xf32>
      %c0_25 = arith.constant 0 : index
      %c0_26 = arith.constant 0 : index
      %37 = vector.load %arg9[%c0_25, %c0_26] : memref<24x32xf32, #tpu.memory_space<vmem>>, vector<24x32xf32>
      tpu.vector_store %arg9[%c0_25, %c0_26], %36 {strides = array<i32>} : memref<24x32xf32, #tpu.memory_space<vmem>>, vector<24x32xf32>,
    } else {
    }
    return
  }
  func.func @transform_0(%arg0: i32, %arg1: i32) -> (i32, i32) {
    %c0_i32 = arith.constant 0 : i32
    %c0_i32_0 = arith.constant 0 : i32
    return %arg0, %c0_i32 : i32, i32
  }
  func.func @transform_1(%arg0: i32, %arg1: i32) -> (i32, i32) {
    %c0_i32 = arith.constant 0 : i32
    %c0_i32_0 = arith.constant 0 : i32
    %c0_i32_1 = arith.constant 0 : i32
    return %c0_i32, %c0_i32_0 : i32, i32
  }
  func.func @transform_2(%arg0: i32, %arg1: i32) -> (i32, i32) {
    %c0_i32 = arith.constant 0 : i32
    %c0_i32_0 = arith.constant 0 : i32
    %c0_i32_1 = arith.constant 0 : i32
    return %c0_i32, %c0_i32_0 : i32, i32
  }
  func.func @transform_3(%arg0: i32, %arg1: i32) -> (i32, i32) {
    %c0_i32 = arith.constant 0 : i32
    %c0_i32_0 = arith.constant 0 : i32
    return %c0_i32, %arg1 : i32, i32
  }
  func.func @transform_4(%arg0: i32, %arg1: i32) -> (i32, i32) {
    %c0_i32 = arith.constant 0 : i32
    %c0_i32_0 = arith.constant 0 : i32
    return %c0_i32, %arg1 : i32, i32
  }
  func.func @transform_5(%arg0: i32, %arg1: i32) -> (i32, i32) {
    %c0_i32 = arith.constant 0 : i32
    %c0_i32_0 = arith.constant 0 : i32
    return %arg1, %c0_i32 : i32, i32
  }
  func.func @transform_6(%arg0: i32, %arg1: i32) -> (i32, i32) {
    %c0_i32 = arith.constant 0 : i32
    %c0_i32_0 = arith.constant 0 : i32
    %c0_i32_1 = arith.constant 0 : i32
    return %c0_i32, %c0_i32_0 : i32, i32
  }
  func.func @transform_7(%arg0: i32, %arg1: i32) -> (i32, i32) {
    %c0_i32 = arith.constant 0 : i32
    %c0_i32_0 = arith.constant 0 : i32
    return %arg0, %c0_i32 : i32, i32
  }
}

module attributes {stable_mosaic.version = 11 : i64} {
  func.func @kernel(%arg0: i32, %arg1: i32, %arg2: memref<16x32xf32, #tpu.memory_space<vmem>>, %arg3: memref<64x32xbf16, #tpu.memory_space<vmem>>, %arg4: memref<1x32xf32, #tpu.memory_space<vmem>>, %arg5: memref<1x32xf32, #tpu.memory_space<vmem>>, %arg6: memref<16x64xf32, #tpu.memory_space<vmem>>) attributes {dimension_semantics = [#tpu.dimension_semantics<parallel>, #tpu.dimension_semantics<parallel>], iteration_bounds = array<i64: 1, 1>, scalar_prefetch = 0 : i64, scratch_operands = 0 : i64, tpu.core_type = #tpu.core_type<tc>, window_params = [{transform_indices = @transform_0, window_bounds = array<i64: 16, 32>}, {transform_indices = @transform_1, window_bounds = array<i64: 64, 32>}, {pipeline_mode = #tpu.pipeline_mode<synchronous>, transform_indices = @transform_2, window_bounds = array<i64: 1, 32>}, {pipeline_mode = #tpu.pipeline_mode<synchronous>, transform_indices = @transform_3, window_bounds = array<i64: 1, 32>}, {transform_indices = @transform_4, window_bounds = array<i64: 16, 64>}]} {
    %c0 = arith.constant 0 : index
    %c0_0 = arith.constant 0 : index
    %0 = vector.load %arg2[%c0, %c0_0] : memref<16x32xf32, #tpu.memory_space<vmem>>, vector<16x32xf32>
    %cst = arith.constant dense<0.000000e+00> : vector<16xf32>
    %1 = vector.multi_reduction <add>, %0, %cst [1] : vector<16x32xf32> to vector<16xf32>
    %2 = vector.shape_cast %1 : vector<16xf32> to vector<16x1xf32>
    %cst_1 = arith.constant 3.200000e+01 : f32
    %3 = vector.broadcast %cst_1 : f32 to vector<16x1xf32>
    %4 = arith.divf %2, %3 : vector<16x1xf32>
    %5 = vector.broadcast %4 : vector<16x1xf32> to vector<16x32xf32>
    %6 = arith.subf %0, %5 : vector<16x32xf32>
    %7 = arith.mulf %6, %6 : vector<16x32xf32>
    %cst_2 = arith.constant dense<0.000000e+00> : vector<16xf32>
    %8 = vector.multi_reduction <add>, %7, %cst_2 [1] : vector<16x32xf32> to vector<16xf32>
    %9 = vector.shape_cast %8 : vector<16xf32> to vector<16x1xf32>
    %cst_3 = arith.constant 3.200000e+01 : f32
    %10 = vector.broadcast %cst_3 : f32 to vector<16x1xf32>
    %11 = arith.divf %9, %10 : vector<16x1xf32>
    %12 = vector.broadcast %4 : vector<16x1xf32> to vector<16x32xf32>
    %13 = arith.subf %0, %12 : vector<16x32xf32>
    %cst_4 = arith.constant 9.99999974E-6 : f32
    %14 = vector.broadcast %cst_4 : f32 to vector<16x1xf32>
    %15 = arith.addf %11, %14 : vector<16x1xf32>
    %16 = math.rsqrt %15 : vector<16x1xf32>
    %17 = vector.broadcast %16 : vector<16x1xf32> to vector<16x32xf32>
    %18 = arith.mulf %13, %17 : vector<16x32xf32>
    %c0_5 = arith.constant 0 : index
    %c0_6 = arith.constant 0 : index
    %19 = vector.load %arg4[%c0_5, %c0_6] : memref<1x32xf32, #tpu.memory_space<vmem>>, vector<1x32xf32>
    %20 = vector.broadcast %19 : vector<1x32xf32> to vector<16x32xf32>
    %21 = arith.mulf %18, %20 : vector<16x32xf32>
    %c0_7 = arith.constant 0 : index
    %c0_8 = arith.constant 0 : index
    %22 = vector.load %arg5[%c0_7, %c0_8] : memref<1x32xf32, #tpu.memory_space<vmem>>, vector<1x32xf32>
    %23 = vector.broadcast %22 : vector<1x32xf32> to vector<16x32xf32>
    %24 = arith.addf %21, %23 : vector<16x32xf32>
    %25 = arith.truncf %24 : vector<16x32xf32> to vector<16x32xbf16>
    %c0_9 = arith.constant 0 : index
    %c0_10 = arith.constant 0 : index
    %26 = vector.load %arg3[%c0_9, %c0_10] : memref<64x32xbf16, #tpu.memory_space<vmem>>, vector<64x32xbf16>
    %cst_11 = arith.constant dense<0.000000e+00> : vector<16x64xf32>
    %27 = tpu.matmul %25, %26, %cst_11 {dimension_numbers = #tpu.dot_dimension_numbers<[1], [1], [0], [0], [0, 0, 1, 0], [], []>} : vector<16x32xbf16>, vector<64x32xbf16>, vector<16x64xf32> -> vector<16x64xf32>
    %c0_12 = arith.constant 0 : index
    %c0_13 = arith.constant 0 : index
    %28 = vector.load %arg6[%c0_12, %c0_13] : memref<16x64xf32, #tpu.memory_space<vmem>>, vector<16x64xf32>
    tpu.vector_store %arg6[%c0_12, %c0_13], %27 {strides = array<i32>} : memref<16x64xf32, #tpu.memory_space<vmem>>, vector<16x64xf32>,
    return
  }
  func.func @transform_0(%arg0: i32, %arg1: i32) -> (i32, i32) {
    %c0_i32 = arith.constant 0 : i32
    %c0_i32_0 = arith.constant 0 : i32
    return %arg0, %c0_i32 : i32, i32
  }
  func.func @transform_1(%arg0: i32, %arg1: i32) -> (i32, i32) {
    %c0_i32 = arith.constant 0 : i32
    %c0_i32_0 = arith.constant 0 : i32
    return %arg1, %c0_i32 : i32, i32
  }
  func.func @transform_2(%arg0: i32, %arg1: i32) -> (i32, i32) {
    %c0_i32 = arith.constant 0 : i32
    %c0_i32_0 = arith.constant 0 : i32
    %c0_i32_1 = arith.constant 0 : i32
    return %c0_i32, %c0_i32_0 : i32, i32
  }
  func.func @transform_3(%arg0: i32, %arg1: i32) -> (i32, i32) {
    %c0_i32 = arith.constant 0 : i32
    %c0_i32_0 = arith.constant 0 : i32
    %c0_i32_1 = arith.constant 0 : i32
    return %c0_i32, %c0_i32_0 : i32, i32
  }
  func.func @transform_4(%arg0: i32, %arg1: i32) -> (i32, i32) {
    %c0_i32 = arith.constant 0 : i32
    return %arg0, %arg1 : i32, i32
  }
}

</mosaic_0001>

<llo_original>
// kernel: chexnet_report_decoder_forward.10
$region0: #{chexnet_report_decoder_forward.10}
  #allocation0 [shape = 'u32[]', space=smem, size = 0x4, offset = 0x4, fixed_abs, tag = 'smem constant byte address 0x4 - core index']
  #allocation1 [shape = 'u32[72,128]{1,0:T(1,128)}', space=vmem, size = 0x9000, scoped, tag = 'internal scratch']
  %s0 = inlined_call_operand.vmem [shape: f32[2,16], index: 0, kind: input, shape index: {}]
  %s1 = inlined_call_operand.vmem [shape: bf16[16,128], index: 1, kind: input, shape index: {}]
  %s2 = inlined_call_operand.vmem [shape: f32[1,128], index: 2, kind: input, shape index: {}]
  %s3 = inlined_call_operand.vmem [shape: f32[2,128], index: 3, kind: output, shape index: {}]
  %s4 = sld [smem:[#allocation0]]
  $region22: #{chexnet_report_decoder_forward.10} parent=0
    _
  %s6 = ssub.s32 1, %s4
  %s7 = scalar_select 0, %s6, %s4
  // Predicated region
  $region2: #{chexnet_report_decoder_forward.10} parent=0 // pred_check
    _
  $region3: #{chexnet_report_decoder_forward.10} parent=0 // pred_check_branch
    %9 = sbr.rel (0) target = $region5
  $region4: #{chexnet_report_decoder_forward.10} parent=0 // pred_region
    _
  $region5: #{chexnet_report_decoder_forward.10} parent=0 // pred_fallthru
    _
  // Predicated region
  $region6: #{chexnet_report_decoder_forward.10} parent=0 // pred_check
    _
  $region7: #{chexnet_report_decoder_forward.10} parent=0 // pred_check_branch
    %11 = sbr.rel (0) target = $region9
  $region8: #{chexnet_report_decoder_forward.10} parent=0 // pred_region
    _
  $region9: #{chexnet_report_decoder_forward.10} parent=0 // pred_fallthru
    _
  // Predicated region
  $region10: #{chexnet_report_decoder_forward.10} parent=0 // pred_check
    _
  $region11: #{chexnet_report_decoder_forward.10} parent=0 // pred_check_branch
    %13 = sbr.rel (0) target = $region13
  $region12: #{chexnet_report_decoder_forward.10} parent=0 // pred_region
    _
  $region13: #{chexnet_report_decoder_forward.10} parent=0 // pred_fallthru
    _
  %v15 = vld [vmem:[%s0] sm:$0x3]
  %v16 = vpack.c.bf16 %v15, %v15
  %v17 = vld [vmem:[%s1] sm:$0xf]
  %v18 = vld [vmem:[%s1 + $0x4] sm:$0xf]
  %v19 = vld [vmem:[%s2] sm:$0x1]
  %v21 = vperm.slane %v19, 0
  %v25 = vunpack.c.l.b16 %v17
  %v26 = vunpack.c.l.b16 %v18
  %v27 = vpack.c.b16 %v26, %v25
  %vm29 = vcmask 130048
  %v31 = vsel %vm29, %v16, 0
  %33 = vmatpush.bf16.msra.mxu0 0
  %34 = vmatpush.bf16.msra.mxu0 0
  %35 = vmatpush.bf16.msra.mxu0 0
  %36 = vmatpush.bf16.msra.mxu0 0
  %37 = vmatpush.bf16.msra.mxu0 0
  %38 = vmatpush.bf16.msra.mxu0 0
  %39 = vmatpush.bf16.msra.mxu0 0
  %40 = vmatpush.bf16.msra.mxu0 %v27
  %41 = vmatmul.bf16.gmra.mxu0 %v31
  %v42 = vpop.f32.mrf.mxu0
  %v43 = vadd.f32 %v21, %v42
  %v44 = vpop.f32.mrf.mxu0
  %45 = vdwg.mxu0
  %46 = vst [vmem:[%s3] sm:$0x3] %v43
  // Predicated region
  $region14: #{chexnet_report_decoder_forward.10} parent=0 // pred_check
    _
  $region15: #{chexnet_report_decoder_forward.10} parent=0 // pred_check_branch
    %48 = sbr.rel (0) target = $region17
  $region16: #{chexnet_report_decoder_forward.10} parent=0 // pred_region
    _
  $region17: #{chexnet_report_decoder_forward.10} parent=0 // pred_fallthru
    _
  // Predicated region
  $region18: #{chexnet_report_decoder_forward.10} parent=0 // pred_check
    _
  $region19: #{chexnet_report_decoder_forward.10} parent=0 // pred_check_branch
    %50 = sbr.rel (0) target = $region21
  $region20: #{chexnet_report_decoder_forward.10} parent=0 // pred_region
    _
  $region21: #{chexnet_report_decoder_forward.10} parent=0 // pred_fallthru
    _

// kernel: chexnet_report_decoder_forward.11
$region0: #{chexnet_report_decoder_forward.11}
  #allocation0 [shape = 'u32[]', space=smem, size = 0x4, offset = 0x4, fixed_abs, tag = 'smem constant byte address 0x4 - core index']
  #allocation1 [shape = 'u32[72,128]{1,0:T(1,128)}', space=vmem, size = 0x9000, scoped, tag = 'internal scratch']
  %s0 = inlined_call_operand.vmem [shape: f32[24,32], index: 0, kind: input, shape index: {}]
  %s1 = inlined_call_operand.vmem [shape: bf16[32,96], index: 1, kind: input, shape index: {}]
  %s2 = inlined_call_operand.vmem [shape: f32[1,32], index: 2, kind: input, shape index: {}]
  %s3 = inlined_call_operand.vmem [shape: f32[1,32], index: 3, kind: input, shape index: {}]
  %s4 = inlined_call_operand.vmem [shape: f32[1,96], index: 4, kind: input, shape index: {}]
  %s5 = inlined_call_operand.vmem [shape: bf16[24,96], index: 5, kind: output, shape index: {}]
  %s6 = sld [smem:[#allocation0]]
  $region30: #{chexnet_report_decoder_forward.11} parent=0
    _
  %s8 = ssub.s32 1, %s6
  %s9 = scalar_select 0, %s8, %s6
  // Predicated region
  $region2: #{chexnet_report_decoder_forward.11} parent=0 // pred_check
    _
  $region3: #{chexnet_report_decoder_forward.11} parent=0 // pred_check_branch
    %11 = sbr.rel (0) target = $region5
  $region4: #{chexnet_report_decoder_forward.11} parent=0 // pred_region
    _
  $region5: #{chexnet_report_decoder_forward.11} parent=0 // pred_fallthru
    _
  // Predicated region
  $region6: #{chexnet_report_decoder_forward.11} parent=0 // pred_check
    _
  $region7: #{chexnet_report_decoder_forward.11} parent=0 // pred_check_branch
    %13 = sbr.rel (0) target = $region9
  $region8: #{chexnet_report_decoder_forward.11} parent=0 // pred_region
    _
  $region9: #{chexnet_report_decoder_forward.11} parent=0 // pred_fallthru
    _
  // Predicated region
  $region10: #{chexnet_report_decoder_forward.11} parent=0 // pred_check
    _
  $region11: #{chexnet_report_decoder_forward.11} parent=0 // pred_check_branch
    %15 = sbr.rel (0) target = $region13
  $region12: #{chexnet_report_decoder_forward.11} parent=0 // pred_region
    _
  $region13: #{chexnet_report_decoder_forward.11} parent=0 // pred_fallthru
    _
  // Predicated region
  $region14: #{chexnet_report_decoder_forward.11} parent=0 // pred_check
    _
  $region15: #{chexnet_report_decoder_forward.11} parent=0 // pred_check_branch
    %17 = sbr.rel (0) target = $region17
  $region16: #{chexnet_report_decoder_forward.11} parent=0 // pred_region
    _
  $region17: #{chexnet_report_decoder_forward.11} parent=0 // pred_fallthru
    _
  // Predicated region
  $region18: #{chexnet_report_decoder_forward.11} parent=0 // pred_check
    _
  $region19: #{chexnet_report_decoder_forward.11} parent=0 // pred_check_branch
    %19 = sbr.rel (0) target = $region21
  $region20: #{chexnet_report_decoder_forward.11} parent=0 // pred_region
    _
  $region21: #{chexnet_report_decoder_forward.11} parent=0 // pred_fallthru
    _
  %v21 = vld [vmem:[%s0] sm:$0xff]
  %v22 = vld [vmem:[%s0 + $0x8] sm:$0xff]
  %v23 = vld [vmem:[%s0 + $0x10] sm:$0xff]
  %vm24 = vcmask 261120
  %v25 = vsel %vm24, %v21, 0.0
  %26 = vadd.xlane.f32.xlu0 %v25
  %v27 = vpop.xlane.xlu0 %26
  %v28 = vsel %vm24, %v22, 0.0
  %29 = vadd.xlane.f32.xlu0 %v28
  %v30 = vpop.xlane.xlu0 %29
  %v31 = vsel %vm24, %v23, 0.0
  %32 = vadd.xlane.f32.xlu0 %v31
  %v33 = vpop.xlane.xlu0 %32
  %v34 = vrcp.pop 32.0
  %v35 = vmul.f32 32.0, %v34
  %v36 = vsub.f32 1.0, %v35
  %v37 = vmul.f32 %v34, %v36
  %v38 = vadd.f32 %v34, %v37
  %vm39 = vweird.f32 %v34
  %v40 = vsel %vm39, %v34, %v38
  %v41 = vmul.f32 %v27, %v40
  %v42 = vmul.f32 %v30, %v40
  %v43 = vmul.f32 %v33, %v40
  %v44 = vsub.f32 %v21, %v41
  %v45 = vsub.f32 %v22, %v42
  %v46 = vsub.f32 %v23, %v43
  %v47 = vmul.f32 %v44, %v44
  %v48 = vmul.f32 %v45, %v45
  %v49 = vmul.f32 %v46, %v46
  %v50 = vsel %vm24, %v47, 0.0
  %51 = vadd.xlane.f32.xlu0 %v50
  %v52 = vpop.xlane.xlu0 %51
  %v53 = vsel %vm24, %v48, 0.0
  %54 = vadd.xlane.f32.xlu0 %v53
  %v55 = vpop.xlane.xlu0 %54
  %v56 = vsel %vm24, %v49, 0.0
  %57 = vadd.xlane.f32.xlu0 %v56
  %v58 = vpop.xlane.xlu0 %57
  %v59 = vmul.f32 %v52, %v40
  %v60 = vmul.f32 %v55, %v40
  %v61 = vmul.f32 %v58, %v40
  %v62 = vadd.f32 %v59, 1e-05
  %v63 = vadd.f32 %v60, 1e-05
  %v64 = vadd.f32 %v61, 1e-05
  %v65 = vrsqrt.pop %v62
  %v66 = vmul.f32 %v65, %v62
  %v67 = vmul.f32 %v66, %v65
  %v68 = vmul.f32 0.5, %v67
  %v69 = vsub.f32 1.5, %v68
  %v70 = vmul.f32 %v65, %v69
  %vm71 = vweird.f32 %v62
  %vm72 = vweird.f32 %v65
  %vm73 = vmor %vm71, %vm72
  %v74 = vsel %vm73, %v65, %v70
  %v75 = vrsqrt.pop %v63
  %v76 = vmul.f32 %v75, %v63
  %v77 = vmul.f32 %v76, %v75
  %v78 = vmul.f32 0.5, %v77
  %v79 = vsub.f32 1.5, %v78
  %v80 = vmul.f32 %v75, %v79
  %vm81 = vweird.f32 %v63
  %vm82 = vweird.f32 %v75
  %vm83 = vmor %vm81, %vm82
  %v84 = vsel %vm83, %v75, %v80
  %v85 = vrsqrt.pop %v64
  %v86 = vmul.f32 %v85, %v64
  %v87 = vmul.f32 %v86, %v85
  %v88 = vmul.f32 0.5, %v87
  %v89 = vsub.f32 1.5, %v88
  %v90 = vmul.f32 %v85, %v89
  %vm91 = vweird.f32 %v64
  %vm92 = vweird.f32 %v85
  %vm93 = vmor %vm91, %vm92
  %v94 = vsel %vm93, %v85, %v90
  %v95 = vmul.f32 %v44, %v74
  %v96 = vmul.f32 %v45, %v84
  %v97 = vmul.f32 %v46, %v94
  %v98 = vld [vmem:[%s2] sm:$0x1]
  %v100 = vperm.slane %v98, 0
  %v102 = vmul.f32 %v95, %v100
  %v103 = vmul.f32 %v96, %v100
  %v104 = vmul.f32 %v97, %v100
  %v105 = vld [vmem:[%s3] sm:$0x1]
  %v107 = vperm.slane %v105, 0
  %v109 = vadd.f32 %v102, %v107
  %v110 = vadd.f32 %v103, %v107
  %v111 = vadd.f32 %v104, %v107
  %v112 = vpack.c.bf16 %v110, %v109
  %v113 = vpack.c.bf16 %v111, %v111
  %v114 = vld [vmem:[%s1] sm:$0xf]
  %v115 = vld [vmem:[%s1 + $0x4] sm:$0xf]
  %v116 = vld [vmem:[%s1 + $0x8] sm:$0xf]
  %v117 = vld [vmem:[%s1 + $0xc] sm:$0xf]
  %v118 = vld [vmem:[%s4] sm:$0x1]
  %v120 = vperm.slane %v118, 0
  %v126 = vunpack.c.l.b16 %v114
  %v127 = vunpack.c.l.b16 %v115
  %v128 = vunpack.c.l.b16 %v116
  %v129 = vunpack.c.l.b16 %v117
  %v130 = vpack.c.b16 %v127, %v126
  %v131 = vpack.c.b16 %v129, %v128
  %v135 = vsel %vm24, %v112, 0
  %v138 = vsel %vm24, %v113, 0
  %140 = vmatpush.bf16.msra.mxu0 0
  %141 = vmatpush.bf16.msra.mxu0 0
  %142 = vmatpush.bf16.msra.mxu0 0
  %143 = vmatpush.bf16.msra.mxu0 0
  %144 = vmatpush.bf16.msra.mxu0 0
  %145 = vmatpush.bf16.msra.mxu0 0
  %146 = vmatpush.bf16.msra.mxu0 %v131
  %147 = vmatpush.bf16.msra.mxu0 %v130
  %148 = vmatmul.bf16.gmra.mxu0 %v135
  %v149 = vpop.f32.mrf.mxu0
  %v150 = vadd.f32 %v120, %v149
  %v151 = vpop.f32.mrf.mxu0
  %v152 = vadd.f32 %v120, %v151
  %153 = vmatmul.bf16.gmra.mxu0 %v138
  %v154 = vpop.f32.mrf.mxu0
  %v155 = vadd.f32 %v120, %v154
  %v156 = vpop.f32.mrf.mxu0
  %157 = vdwg.mxu0
  %v158 = vpack.c.bf16 %v150, %v150
  %v159 = vpack.c.bf16 %v152, %v152
  %v160 = vpack.c.bf16 %v155, %v155
  %vm161 = vcmask 781312
  %162 = vst.msk [vmem:[%s5] sm:$0xf] %vm161, %v158
  %163 = vst.msk [vmem:[%s5 + $0x4] sm:$0xf] %vm161, %v159
  %164 = vst.msk [vmem:[%s5 + $0x8] sm:$0xf] %vm161, %v160
  // Predicated region
  $region22: #{chexnet_report_decoder_forward.11} parent=0 // pred_check
    _
  $region23: #{chexnet_report_decoder_forward.11} parent=0 // pred_check_branch
    %166 = sbr.rel (0) target = $region25
  $region24: #{chexnet_report_decoder_forward.11} parent=0 // pred_region
    _
  $region25: #{chexnet_report_decoder_forward.11} parent=0 // pred_fallthru
    _
  // Predicated region
  $region26: #{chexnet_report_decoder_forward.11} parent=0 // pred_check
    _
  $region27: #{chexnet_report_decoder_forward.11} parent=0 // pred_check_branch
    %168 = sbr.rel (0) target = $region29
  $region28: #{chexnet_report_decoder_forward.11} parent=0 // pred_region
    _
  $region29: #{chexnet_report_decoder_forward.11} parent=0 // pred_fallthru
    _

// kernel: chexnet_report_decoder_forward.12
$region0: #{chexnet_report_decoder_forward.12}
  #allocation0 [shape = 'u32[]', space=smem, size = 0x4, offset = 0x4, fixed_abs, tag = 'smem constant byte address 0x4 - core index']
  #allocation1 [shape = 'u32[72,128]{1,0:T(1,128)}', space=vmem, size = 0x9000, scoped, tag = 'internal scratch']
  #allocation2 [shape = 'f32[12,1]{1,0:T(8,128)}', space=vmem, size = 0x2000, scoped, tag = 'scratch operand']
  #allocation3 [shape = 'f32[12,1]{1,0:T(8,128)}', space=vmem, size = 0x2000, scoped, tag = 'scratch operand']
  #allocation4 [shape = 'f32[12,16]{1,0:T(8,128)}', space=vmem, size = 0x2000, scoped, tag = 'scratch operand']
  %s0 = inlined_call_operand.vmem [shape: bf16[2,2,12,16], index: 0, kind: input, shape index: {}]
  %s1 = inlined_call_operand.vmem [shape: bf16[2,2,12,16], index: 1, kind: input, shape index: {}]
  %s2 = inlined_call_operand.vmem [shape: bf16[2,2,12,16], index: 2, kind: input, shape index: {}]
  %s3 = inlined_call_operand.vmem [shape: f32[2,12,12], index: 3, kind: input, shape index: {}]
  %s4 = inlined_call_operand.vmem [shape: bf16[2,2,12,16], index: 4, kind: output, shape index: {}]
  %s5 = sld [smem:[#allocation0]]
  $region57: #{chexnet_report_decoder_forward.12} parent=0
    _
  %s7 = ssub.s32 1, %s5
  %s8 = scalar_select 0, %s7, %s5
  loop: start=0, step=1, limit=6
  $region2: #{chexnet_report_decoder_forward.12} parent=0 // loop_pre_header
    _
  $region3: #{chexnet_report_decoder_forward.12} parent=0 // loop_header
    %s10 = sphi 0, %s14
    %p11 = scmp.ge.s32.totalorder %s10, 6
    %s17 = sphi 0, %s36
    %s18 = sphi 0, %s32
    %s19 = sphi 0, %s28
    %s20 = sphi 0, %s17
    %s21 = sphi 0, %s18
    %s22 = sphi 0, %s19
    %s23 = sphi 0, %s20
    %s24 = sphi 0, %s21
    %s25 = sphi 0, %s22
    %s41 = sphi 0, %s43
    %s44 = sphi 0, %s41
    %s45 = sphi 0, %s44
    %s61 = sphi 0, %s45
    %s71 = sphi 0, %s73
    %s74 = sphi 0, %s71
    %s75 = sphi 0, %s74
    %s91 = sphi 0, %s75
    %s101 = sphi 0, %s103
    %s104 = sphi 0, %s101
    %s105 = sphi 0, %s104
    %s121 = sphi 0, %s105
    %s129 = sphi 0, %s131
    %s132 = sphi 0, %s129
    %s133 = sphi 0, %s132
    %s149 = sphi 0, %s133
    %s157 = sphi 0, %s159
    %s160 = sphi 0, %s157
    %s161 = sphi 0, %s160
    %s177 = sphi 0, %s161
  $region4: #{chexnet_report_decoder_forward.12} parent=0 // loop_header_branch
    %13 = sbr.rel (%p11) target = $region8
  $region5: #{chexnet_report_decoder_forward.12} parent=0 // loop_body
    %s15 = ssub.s32 %s10, 1
    %s16 = ssub.s32 %s10, 2
    %s26 = sadd.s32 1, %s19
    %p27 = scmp.ge.s32.totalorder %s26, 1
    %s28 = scalar_select %p27, 0, %s26
    %s29 = sadd.s32 1, %s18
    %s30 = scalar_select %p27, %s29, %s18
    %p31 = scmp.ge.s32.totalorder %s30, 2
    %s32 = scalar_select %p31, 0, %s30
    %s33 = sadd.s32 1, %s17
    %s34 = scalar_select %p31, %s33, %s17
    %p35 = scmp.ge.s32.totalorder %s34, 2
    %s36 = scalar_select %p35, 0, %s34
    %s37 = ssub.s32 %s17, %s36
    %s38 = ssub.s32 %s18, %s32
    %s39 = sor.u32 %s37, %s38
    %p40 = scmp.eq.s32.totalorder %s39, 0
    %s42 = sadd.s32 %s41, 1
    %s43 = scalar_select %p40, %s41, %s42
    %p46 = pneg %p40
    %p47 = scmp.eq.s32.totalorder %s10, 3
    %p48 = por %p46, %p47
    %p49 = scmp.ne.s32.totalorder %s41, %s44
    %p50 = scmp.eq.s32.totalorder %s10, 0
    %p51 = por %p49, %p50
    %p52 = scmp.ne.s32.totalorder %s41, %s44
    %p53 = scmp.eq.s32.totalorder %s15, 3
    %p54 = por %p52, %p53
    %p55 = scmp.ne.s32.totalorder %s44, %s45
    %p56 = scmp.eq.s32.totalorder %s15, 0
    %p57 = por %p55, %p56
    %p58 = scmp.ne.s32.totalorder %s44, %s45
    %p59 = scmp.eq.s32.totalorder %s16, 3
    %p60 = por %p58, %p59
    %p62 = scmp.ne.s32.totalorder %s45, %s61
    %p63 = scmp.eq.s32.totalorder %s16, 0
    %p64 = por %p62, %p63
    %s65 = ssub.s32 %s17, %s36
    %s66 = ssub.s32 %s18, %s32
    %s67 = sor.u32 %s65, %s66
    %s68 = ssub.s32 %s19, %s28
    %s69 = sor.u32 %s67, %s68
    %p70 = scmp.eq.s32.totalorder %s69, 0
    %s72 = sadd.s32 %s71, 1
    %s73 = scalar_select %p70, %s71, %s72
    %p76 = pneg %p70
    %p77 = scmp.eq.s32.totalorder %s10, 3
    %p78 = por %p76, %p77
    %p79 = scmp.ne.s32.totalorder %s71, %s74
    %p80 = scmp.eq.s32.totalorder %s10, 0
    %p81 = por %p79, %p80
    %p82 = scmp.ne.s32.totalorder %s71, %s74
    %p83 = scmp.eq.s32.totalorder %s15, 3
    %p84 = por %p82, %p83
    %p85 = scmp.ne.s32.totalorder %s74, %s75
    %p86 = scmp.eq.s32.totalorder %s15, 0
    %p87 = por %p85, %p86
    %p88 = scmp.ne.s32.totalorder %s74, %s75
    %p89 = scmp.eq.s32.totalorder %s16, 3
    %p90 = por %p88, %p89
    %p92 = scmp.ne.s32.totalorder %s75, %s91
    %p93 = scmp.eq.s32.totalorder %s16, 0
    %p94 = por %p92, %p93
    %s95 = ssub.s32 %s17, %s36
    %s96 = ssub.s32 %s18, %s32
    %s97 = sor.u32 %s95, %s96
    %s98 = ssub.s32 %s19, %s28
    %s99 = sor.u32 %s97, %s98
    %p100 = scmp.eq.s32.totalorder %s99, 0
    %s102 = sadd.s32 %s101, 1
    %s103 = scalar_select %p100, %s101, %s102
    %p106 = pneg %p100
    %p107 = scmp.eq.s32.totalorder %s10, 3
    %p108 = por %p106, %p107
    %p109 = scmp.ne.s32.totalorder %s101, %s104
    %p110 = scmp.eq.s32.totalorder %s10, 0
    %p111 = por %p109, %p110
    %p112 = scmp.ne.s32.totalorder %s101, %s104
    %p113 = scmp.eq.s32.totalorder %s15, 3
    %p114 = por %p112, %p113
    %p115 = scmp.ne.s32.totalorder %s104, %s105
    %p116 = scmp.eq.s32.totalorder %s15, 0
    %p117 = por %p115, %p116
    %p118 = scmp.ne.s32.totalorder %s104, %s105
    %p119 = scmp.eq.s32.totalorder %s16, 3
    %p120 = por %p118, %p119
    %p122 = scmp.ne.s32.totalorder %s105, %s121
    %p123 = scmp.eq.s32.totalorder %s16, 0
    %p124 = por %p122, %p123
    %s125 = ssub.s32 %s17, %s36
    %s126 = ssub.s32 %s19, %s28
    %s127 = sor.u32 %s125, %s126
    %p128 = scmp.eq.s32.totalorder %s127, 0
    %s130 = sadd.s32 %s129, 1
    %s131 = scalar_select %p128, %s129, %s130
    %p134 = pneg %p128
    %p135 = scmp.eq.s32.totalorder %s10, 3
    %p136 = por %p134, %p135
    %p137 = scmp.ne.s32.totalorder %s129, %s132
    %p138 = scmp.eq.s32.totalorder %s10, 0
    %p139 = por %p137, %p138
    %p140 = scmp.ne.s32.totalorder %s129, %s132
    %p141 = scmp.eq.s32.totalorder %s15, 3
    %p142 = por %p140, %p141
    %p143 = scmp.ne.s32.totalorder %s132, %s133
    %p144 = scmp.eq.s32.totalorder %s15, 0
    %p145 = por %p143, %p144
    %p146 = scmp.ne.s32.totalorder %s132, %s133
    %p147 = scmp.eq.s32.totalorder %s16, 3
    %p148 = por %p146, %p147
    %p150 = scmp.ne.s32.totalorder %s133, %s149
    %p151 = scmp.eq.s32.totalorder %s16, 0
    %p152 = por %p150, %p151
    %s153 = ssub.s32 %s17, %s36
    %s154 = ssub.s32 %s18, %s32
    %s155 = sor.u32 %s153, %s154
    %p156 = scmp.eq.s32.totalorder %s155, 0
    %s158 = sadd.s32 %s157, 1
    %s159 = scalar_select %p156, %s157, %s158
    %p162 = pneg %p156
    %p163 = scmp.eq.s32.totalorder %s10, 3
    %p164 = por %p162, %p163
    %p165 = scmp.ne.s32.totalorder %s157, %s160
    %p166 = scmp.eq.s32.totalorder %s10, 0
    %p167 = por %p165, %p166
    %p168 = scmp.ne.s32.totalorder %s157, %s160
    %p169 = scmp.eq.s32.totalorder %s15, 3
    %p170 = por %p168, %p169
    %p171 = scmp.ne.s32.totalorder %s160, %s161
    %p172 = scmp.eq.s32.totalorder %s15, 0
    %p173 = por %p171, %p172
    %p174 = scmp.ne.s32.totalorder %s160, %s161
    %p175 = scmp.eq.s32.totalorder %s16, 3
    %p176 = por %p174, %p175
    %p178 = scmp.ne.s32.totalorder %s161, %s177
    %p179 = scmp.eq.s32.totalorder %s16, 0
    %p180 = por %p178, %p179
    %p181 = scmp.le.s32.totalorder 1, %s10
    %p182 = scmp.lt.s32.totalorder %s10, 5
    %p183 = pnand %p181, %p182
    %p184 = pneg %p183
    // Predicated region
    $region9: #{chexnet_report_decoder_forward.12} parent=5 // pred_check
      _
    $region10: #{chexnet_report_decoder_forward.12} parent=5 // pred_check_branch
      %186 = sbr.rel (%p183) target = $region12
    $region11: #{chexnet_report_decoder_forward.12} parent=5 // pred_region
      %s187 = ssub.s32 %s10, 1
    $region12: #{chexnet_report_decoder_forward.12} parent=5 // pred_fallthru
      _
    %p188 = scmp.lt.s32.totalorder %s10, 4
    // Predicated region
    $region13: #{chexnet_report_decoder_forward.12} parent=5 // pred_check
      %p189 = pneg %p188
    $region14: #{chexnet_report_decoder_forward.12} parent=5 // pred_check_branch
      %191 = sbr.rel (%p189) target = $region16
    $region15: #{chexnet_report_decoder_forward.12} parent=5 // pred_region
      // Predicated region
      $region17: #{chexnet_report_decoder_forward.12} parent=15 // pred_check
        %p192 = pneg %p51
      $region18: #{chexnet_report_decoder_forward.12} parent=15 // pred_check_branch
        %194 = sbr.rel (%p192) target = $region20
      $region19: #{chexnet_report_decoder_forward.12} parent=15 // pred_region
        %p195 = scmp.lt.s32.totalorder %s17, 1
        %s196 = scalar_select %p195, %s17, 1
        %p197 = scmp.lt.s32.totalorder %s18, 1
        %s198 = scalar_select %p197, %s18, 1
        %s199 = smul.addr %s198, 2
        %s200 = smul.addr %s196, 4
        %s201 = sadd.s32 %s199, %s200
        %s202 = smul.addr %s201, 4
        %s203 = scalar_lea.vmem %s0, %s202
      $region20: #{chexnet_report_decoder_forward.12} parent=15 // pred_fallthru
        _
      // Predicated region
      $region21: #{chexnet_report_decoder_forward.12} parent=15 // pred_check
        %p204 = pneg %p81
      $region22: #{chexnet_report_decoder_forward.12} parent=15 // pred_check_branch
        %206 = sbr.rel (%p204) target = $region24
      $region23: #{chexnet_report_decoder_forward.12} parent=15 // pred_region
        %s207 = smul.u32 2, %s19
        %p208 = scmp.lt.s32.totalorder %s17, 1
        %s209 = scalar_select %p208, %s17, 1
        %p210 = scmp.lt.s32.totalorder %s18, 1
        %s211 = scalar_select %p210, %s18, 1
        %p212 = scmp.lt.s32.totalorder %s207, 1
        %s213 = scalar_select %p212, %s207, 1
        %s214 = smul.addr %s211, 2
        %s215 = sadd.s32 %s213, %s214
        %s216 = smul.addr %s209, 4
        %s217 = sadd.s32 %s215, %s216
        %s218 = smul.addr %s217, 4
        %s219 = scalar_lea.vmem %s1, %s218
        %s220 = smul.u32 2, %s19
      $region24: #{chexnet_report_decoder_forward.12} parent=15 // pred_fallthru
        _
      // Predicated region
      $region25: #{chexnet_report_decoder_forward.12} parent=15 // pred_check
        %p221 = pneg %p111
      $region26: #{chexnet_report_decoder_forward.12} parent=15 // pred_check_branch
        %223 = sbr.rel (%p221) target = $region28
      $region27: #{chexnet_report_decoder_forward.12} parent=15 // pred_region
        %s224 = smul.u32 2, %s19
        %p225 = scmp.lt.s32.totalorder %s17, 1
        %s226 = scalar_select %p225, %s17, 1
        %p227 = scmp.lt.s32.totalorder %s18, 1
        %s228 = scalar_select %p227, %s18, 1
        %p229 = scmp.lt.s32.totalorder %s224, 1
        %s230 = scalar_select %p229, %s224, 1
        %s231 = smul.addr %s228, 2
        %s232 = sadd.s32 %s230, %s231
        %s233 = smul.addr %s226, 4
        %s234 = sadd.s32 %s232, %s233
        %s235 = smul.addr %s234, 4
        %s236 = scalar_lea.vmem %s2, %s235
        %s237 = smul.u32 2, %s19
      $region28: #{chexnet_report_decoder_forward.12} parent=15 // pred_fallthru
        _
      // Predicated region
      $region29: #{chexnet_report_decoder_forward.12} parent=15 // pred_check
        %p238 = pneg %p139
      $region30: #{chexnet_report_decoder_forward.12} parent=15 // pred_check_branch
        %240 = sbr.rel (%p238) target = $region32
      $region31: #{chexnet_report_decoder_forward.12} parent=15 // pred_region
        %p241 = scmp.lt.s32.totalorder %s17, 1
        %s242 = scalar_select %p241, %s17, 1
        %p243 = scmp.lt.s32.totalorder %s19, 0
        %s244 = scalar_select %p243, %s19, 0
        %s245 = smul.addr %s242, 2
        %s246 = sadd.s32 %s244, %s245
        %s247 = smul.addr %s246, 8
        %s248 = scalar_lea.vmem %s3, %s247
      $region32: #{chexnet_report_decoder_forward.12} parent=15 // pred_fallthru
        _
    $region16: #{chexnet_report_decoder_forward.12} parent=5 // pred_fallthru
      _
    %p249 = scmp.le.s32.totalorder 1, %s10
    %p250 = scmp.lt.s32.totalorder %s10, 5
    %p251 = pnand %p249, %p250
    %p252 = pneg %p251
    // Predicated region
    $region33: #{chexnet_report_decoder_forward.12} parent=5 // pred_check
      _
    $region34: #{chexnet_report_decoder_forward.12} parent=5 // pred_check_branch
      %254 = sbr.rel (%p251) target = $region36
    $region35: #{chexnet_report_decoder_forward.12} parent=5 // pred_region
      %s255 = ssub.s32 %s10, 1
      %p256 = scmp.lt.s32.totalorder %s20, 1
      %s257 = scalar_select %p256, %s20, 1
      %p258 = scmp.lt.s32.totalorder %s21, 1
      %s259 = scalar_select %p258, %s21, 1
      %s260 = smul.addr %s259, 2
      %s261 = smul.addr %s257, 4
      %s262 = sadd.s32 %s260, %s261
      %s263 = smul.addr %s262, 4
      %s264 = scalar_lea.vmem %s0, %s263
      %p265 = pneg %p57
      %p266 = pneg %p54
      %s267 = smul.u32 2, %s22
      %p268 = scmp.lt.s32.totalorder %s20, 1
      %s269 = scalar_select %p268, %s20, 1
      %p270 = scmp.lt.s32.totalorder %s21, 1
      %s271 = scalar_select %p270, %s21, 1
      %p272 = scmp.lt.s32.totalorder %s267, 1
      %s273 = scalar_select %p272, %s267, 1
      %s274 = smul.addr %s271, 2
      %s275 = sadd.s32 %s273, %s274
      %s276 = smul.addr %s269, 4
      %s277 = sadd.s32 %s275, %s276
      %s278 = smul.addr %s277, 4
      %s279 = scalar_lea.vmem %s1, %s278
      %p280 = pneg %p87
      %p281 = pneg %p84
      %s282 = smul.u32 2, %s22
      %p283 = scmp.lt.s32.totalorder %s20, 1
      %s284 = scalar_select %p283, %s20, 1
      %p285 = scmp.lt.s32.totalorder %s21, 1
      %s286 = scalar_select %p285, %s21, 1
      %p287 = scmp.lt.s32.totalorder %s282, 1
      %s288 = scalar_select %p287, %s282, 1
      %s289 = smul.addr %s286, 2
      %s290 = sadd.s32 %s288, %s289
      %s291 = smul.addr %s284, 4
      %s292 = sadd.s32 %s290, %s291
      %s293 = smul.addr %s292, 4
      %s294 = scalar_lea.vmem %s2, %s293
      %p295 = pneg %p117
      %p296 = pneg %p114
      %p297 = scmp.lt.s32.totalorder %s20, 1
      %s298 = scalar_select %p297, %s20, 1
      %p299 = scmp.lt.s32.totalorder %s22, 0
      %s300 = scalar_select %p299, %s22, 0
      %s301 = smul.addr %s298, 2
      %s302 = sadd.s32 %s300, %s301
      %s303 = smul.addr %s302, 8
      %s304 = scalar_lea.vmem %s3, %s303
      %p305 = pneg %p145
      %p306 = pneg %p142
      %p307 = pneg %p173
      %p308 = pneg %p170
      %p309 = scmp.lt.s32.totalorder %s20, 1
      %s310 = scalar_select %p309, %s20, 1
      %p311 = scmp.lt.s32.totalorder %s21, 1
      %s312 = scalar_select %p311, %s21, 1
      %s313 = smul.addr %s312, 2
      %s314 = smul.addr %s310, 4
      %s315 = sadd.s32 %s313, %s314
      %s316 = smul.addr %s315, 4
      %s317 = scalar_lea.vmem %s4, %s316
      %p318 = scmp.lt.s32.totalorder %s20, 1
      %s319 = scalar_select %p318, %s20, 1
      %p320 = scmp.lt.s32.totalorder %s21, 1
      %s321 = scalar_select %p320, %s21, 1
      %s322 = smul.addr %s321, 2
      %s323 = smul.addr %s319, 4
      %s324 = sadd.s32 %s322, %s323
      %s325 = smul.addr %s324, 4
      %s326 = scalar_lea.vmem %s0, %s325
      %s327 = smul.u32 2, %s22
      %p328 = scmp.lt.s32.totalorder %s20, 1
      %s329 = scalar_select %p328, %s20, 1
      %p330 = scmp.lt.s32.totalorder %s21, 1
      %s331 = scalar_select %p330, %s21, 1
      %p332 = scmp.lt.s32.totalorder %s327, 1
      %s333 = scalar_select %p332, %s327, 1
      %s334 = smul.addr %s331, 2
      %s335 = sadd.s32 %s333, %s334
      %s336 = smul.addr %s329, 4
      %s337 = sadd.s32 %s335, %s336
      %s338 = smul.addr %s337, 4
      %s339 = scalar_lea.vmem %s1, %s338
      %s340 = smul.u32 2, %s22
      %s341 = smul.u32 2, %s22
      %p342 = scmp.lt.s32.totalorder %s20, 1
      %s343 = scalar_select %p342, %s20, 1
      %p344 = scmp.lt.s32.totalorder %s21, 1
      %s345 = scalar_select %p344, %s21, 1
      %p346 = scmp.lt.s32.totalorder %s341, 1
      %s347 = scalar_select %p346, %s341, 1
      %s348 = smul.addr %s345, 2
      %s349 = sadd.s32 %s347, %s348
      %s350 = smul.addr %s343, 4
      %s351 = sadd.s32 %s349, %s350
      %s352 = smul.addr %s351, 4
      %s353 = scalar_lea.vmem %s2, %s352
      %s354 = smul.u32 2, %s22
      %p355 = scmp.lt.s32.totalorder %s20, 1
      %s356 = scalar_select %p355, %s20, 1
      %p357 = scmp.lt.s32.totalorder %s22, 0
      %s358 = scalar_select %p357, %s22, 0
      %s359 = smul.addr %s356, 2
      %s360 = sadd.s32 %s358, %s359
      %s361 = smul.addr %s360, 8
      %s362 = scalar_lea.vmem %s3, %s361
      %p363 = scmp.lt.s32.totalorder %s20, 1
      %s364 = scalar_select %p363, %s20, 1
      %p365 = scmp.lt.s32.totalorder %s21, 1
      %s366 = scalar_select %p365, %s21, 1
      %s367 = smul.addr %s366, 2
      %s368 = smul.addr %s364, 4
      %s369 = sadd.s32 %s367, %s368
      %s370 = smul.addr %s369, 4
      %s371 = scalar_lea.vmem %s4, %s370
      %p373 = scmp.eq.s32.totalorder %s22, 0
      // Predicated region
      $region37: #{chexnet_report_decoder_forward.12} parent=35 // pred_check
        %p374 = pneg %p373
      $region38: #{chexnet_report_decoder_forward.12} parent=35 // pred_check_branch
        %376 = sbr.rel (%p374) target = $region40
      $region39: #{chexnet_report_decoder_forward.12} parent=35 // pred_region
        %vm377 = vcmask 7168
        %378 = vst.msk [vmem:[#allocation2] sm:$0xff] %vm377, -inf
        %vm379 = vcmask 3072
        %380 = vst.msk [vmem:[#allocation2 + $0x8] sm:$0xf] %vm379, -inf
        %381 = vst.msk [vmem:[#allocation3] sm:$0xff] %vm377, 0.0
        %382 = vst.msk [vmem:[#allocation3 + $0x8] sm:$0xf] %vm379, 0.0
        %vm383 = vcmask 130048
        %384 = vst.msk [vmem:[#allocation4] sm:$0xff] %vm383, 0.0
        %vm385 = vcmask 125952
        %386 = vst.msk [vmem:[#allocation4 + $0x8] sm:$0xf] %vm385, 0.0
      $region40: #{chexnet_report_decoder_forward.12} parent=35 // pred_fallthru
        _
      %v387 = vld [vmem:[%s326] sm:$0xf]
      %v388 = vld [vmem:[%s326 + $0x4] sm:$0x3]
      %v389 = vld [vmem:[%s339] sm:$0xf]
      %v390 = vld [vmem:[%s339 + $0x4] sm:$0x3]
      %v391 = vld [vmem:[%s353] sm:$0xf]
      %v392 = vld [vmem:[%s353 + $0x4] sm:$0x3]
      %v393 = vld [vmem:[%s362] sm:$0xff]
      %v394 = vld [vmem:[%s362 + $0x8] sm:$0xf]
      %v397 = vunpack.c.l.b16 %v387
      %v398 = vunpack.c.l.b16 %v388
      %v399 = vpack.c.b16 %v398, %v397
      %v402 = vunpack.c.l.b16 %v389
      %v403 = vunpack.c.l.b16 %v390
      %v404 = vpack.c.b16 %v403, %v402
      %vm405 = vcmask 130048
      %v407 = vsel %vm405, %v399, 0
      %v410 = vsel %vm405, %v404, 0
      %412 = vmatpush.bf16.xpose.msra.mxu0 0
      %413 = vmatpush.bf16.xpose.msra.mxu0 0
      %414 = vmatpush.bf16.xpose.msra.mxu0 0
      %415 = vmatpush.bf16.xpose.msra.mxu0 0
      %416 = vmatpush.bf16.xpose.msra.mxu0 0
      %417 = vmatpush.bf16.xpose.msra.mxu0 0
      %418 = vmatpush.bf16.xpose.msra.mxu0 0
      %419 = vmatpush.bf16.xpose.msra.mxu0 %v410
      %420 = vmatmul.bf16.gmra.mxu0 %v407
      %v421 = vpop.f32.mrf.mxu0
      %v422 = vadd.f32 0.0, %v421
      %v423 = vpop.f32.mrf.mxu0
      %v424 = vadd.f32 0.0, %v423
      %425 = vdwg.mxu0
      %v426 = vmul.f32 %v422, 0.25
      %v427 = vmul.f32 %v424, 0.25
      %v428 = vadd.f32 %v426, %v393
      %v429 = vadd.f32 %v427, %v394
      %v430 = vld [vmem:[#allocation2] sm:$0xff]
      %v431 = vld [vmem:[#allocation2 + $0x8] sm:$0xf]
      %vm432 = vcmask 97280
      %v433 = vsel %vm432, %v428, -inf
      %434 = vmax.xlane.f32.xlu0 %v433
      %v435 = vpop.xlane.xlu0 %434
      %vm436 = vcmask 93184
      %v437 = vsel %vm436, %v429, -inf
      %438 = vmax.xlane.f32.xlu0 %v437
      %v439 = vpop.xlane.xlu0 %438
      %v440 = vmax.f32 %v430, %v435
      %v441 = vmax.f32 %v431, %v439
      %v442 = vsub.f32 %v430, %v440
      %v443 = vsub.f32 %v431, %v441
      %v444 = vmul.f32 %v442, 1.442695
      %v445 = vpow.pop %v444
      %v446 = vmul.f32 %v443, 1.442695
      %v447 = vpow.pop %v446
      %449 = vset.pattern.permute.xlu0 0
      %450 = vperm.xlu0 %449, %v440
      %v451 = vpop.permute.xlu0 %450
      %454 = vset.pattern.permute.xlu0 0
      %455 = vperm.xlu0 %454, %v441
      %v456 = vpop.permute.xlu0 %455
      %v458 = vsub.f32 %v428, %v451
      %v459 = vsub.f32 %v429, %v456
      %v460 = vmul.f32 %v458, 1.442695
      %v461 = vpow.pop %v460
      %v462 = vmul.f32 %v459, 1.442695
      %v463 = vpow.pop %v462
      %v464 = vld [vmem:[#allocation3] sm:$0xff]
      %v465 = vld [vmem:[#allocation3 + $0x8] sm:$0xf]
      %v466 = vmul.f32 %v445, %v464
      %v467 = vmul.f32 %v447, %v465
      %v468 = vsel %vm432, %v461, 0.0
      %469 = vadd.xlane.f32.xlu0 %v468
      %v470 = vpop.xlane.xlu0 %469
      %v471 = vsel %vm436, %v463, 0.0
      %472 = vadd.xlane.f32.xlu0 %v471
      %v473 = vpop.xlane.xlu0 %472
      %v474 = vadd.f32 %v466, %v470
      %v475 = vadd.f32 %v467, %v473
      %vm476 = vcmask 7168
      %477 = vst.msk [vmem:[#allocation3] sm:$0xff] %vm476, %v474
      %vm478 = vcmask 3072
      %479 = vst.msk [vmem:[#allocation3 + $0x8] sm:$0xf] %vm478, %v475
      %v480 = vld [vmem:[#allocation4] sm:$0xff]
      %v481 = vld [vmem:[#allocation4 + $0x8] sm:$0xf]
      %483 = vset.pattern.permute.xlu0 0
      %484 = vperm.xlu0 %483, %v445
      %v485 = vpop.permute.xlu0 %484
      %488 = vset.pattern.permute.xlu0 0
      %489 = vperm.xlu0 %488, %v447
      %v490 = vpop.permute.xlu0 %489
      %v492 = vmul.f32 %v485, %v480
      %v493 = vmul.f32 %v490, %v481
      %v494 = vpack.c.bf16 %v463, %v461
      %v497 = vunpack.c.l.b16 %v391
      %v498 = vunpack.c.l.b16 %v392
      %v499 = vpack.c.b16 %v498, %v497
      %v501 = vsel %vm432, %v494, 0
      %vm503 = vcmask 1045504
      %v505 = vsel %vm503, %v499, 0
      %507 = vmatpush.bf16.msra.mxu0 0
      %508 = vmatpush.bf16.msra.mxu0 0
      %509 = vmatpush.bf16.msra.mxu0 0
      %510 = vmatpush.bf16.msra.mxu0 0
      %511 = vmatpush.bf16.msra.mxu0 0
      %512 = vmatpush.bf16.msra.mxu0 0
      %513 = vmatpush.bf16.msra.mxu0 0
      %514 = vmatpush.bf16.msra.mxu0 %v505
      %515 = vmatmul.bf16.gmra.mxu0 %v501
      %v516 = vpop.f32.mrf.mxu0
      %v517 = vadd.f32 0.0, %v516
      %v518 = vpop.f32.mrf.mxu0
      %v519 = vadd.f32 0.0, %v518
      %520 = vdwg.mxu0
      %v521 = vadd.f32 %v492, %v517
      %v522 = vadd.f32 %v493, %v519
      %523 = vst.msk [vmem:[#allocation4] sm:$0xff] %vm405, %v521
      %vm524 = vcmask 125952
      %525 = vst.msk [vmem:[#allocation4 + $0x8] sm:$0xf] %vm524, %v522
      %526 = vst.msk [vmem:[#allocation2] sm:$0xff] %vm476, %v440
      %527 = vst.msk [vmem:[#allocation2 + $0x8] sm:$0xf] %vm478, %v441
      // Predicated region
      $region41: #{chexnet_report_decoder_forward.12} parent=35 // pred_check
        %p528 = pneg %p373
      $region42: #{chexnet_report_decoder_forward.12} parent=35 // pred_check_branch
        %530 = sbr.rel (%p528) target = $region44
      $region43: #{chexnet_report_decoder_forward.12} parent=35 // pred_region
        %v531 = vld [vmem:[#allocation4] sm:$0xff]
        %v532 = vld [vmem:[#allocation4 + $0x8] sm:$0xf]
        %v533 = vld [vmem:[#allocation3] sm:$0xff]
        %v534 = vld [vmem:[#allocation3 + $0x8] sm:$0xf]
        %v535 = vrcp.pop %v533
        %v536 = vrcp.pop %v534
        %538 = vset.pattern.permute.xlu0 0
        %539 = vperm.xlu0 %538, %v535
        %v540 = vpop.permute.xlu0 %539
        %543 = vset.pattern.permute.xlu0 0
        %544 = vperm.xlu0 %543, %v536
        %v545 = vpop.permute.xlu0 %544
        %v547 = vmul.f32 %v531, %v540
        %v548 = vmul.f32 %v532, %v545
        %v549 = vpack.c.bf16 %v547, %v547
        %v550 = vpack.c.bf16 %v548, %v548
        %551 = vst.msk [vmem:[%s371] sm:$0xf] %vm524, %v549
        %vm552 = vcmask 123904
        %553 = vst.msk [vmem:[%s371 + $0x4] sm:$0x3] %vm552, %v550
      $region44: #{chexnet_report_decoder_forward.12} parent=35 // pred_fallthru
        _
      %p554 = scmp.lt.s32.totalorder %s20, 1
      %s555 = scalar_select %p554, %s20, 1
      %p556 = scmp.lt.s32.totalorder %s21, 1
      %s557 = scalar_select %p556, %s21, 1
      %s558 = smul.addr %s557, 2
      %s559 = smul.addr %s555, 4
      %s560 = sadd.s32 %s558, %s559
      %s561 = smul.addr %s560, 4
      %s562 = scalar_lea.vmem %s4, %s561
      // Predicated region
      $region45: #{chexnet_report_decoder_forward.12} parent=35 // pred_check
        %p563 = pneg %p170
      $region46: #{chexnet_report_decoder_forward.12} parent=35 // pred_check_branch
        %565 = sbr.rel (%p563) target = $region48
      $region47: #{chexnet_report_decoder_forward.12} parent=35 // pred_region
        _
      $region48: #{chexnet_report_decoder_forward.12} parent=35 // pred_fallthru
        _
    $region36: #{chexnet_report_decoder_forward.12} parent=5 // pred_fallthru
      _
    %p566 = scmp.le.s32.totalorder 2, %s10
    // Predicated region
    $region49: #{chexnet_report_decoder_forward.12} parent=5 // pred_check
      %p567 = pneg %p566
    $region50: #{chexnet_report_decoder_forward.12} parent=5 // pred_check_branch
      %569 = sbr.rel (%p567) target = $region52
    $region51: #{chexnet_report_decoder_forward.12} parent=5 // pred_region
      %s570 = ssub.s32 %s10, 2
      // Predicated region
      $region53: #{chexnet_report_decoder_forward.12} parent=51 // pred_check
        %p571 = pneg %p176
      $region54: #{chexnet_report_decoder_forward.12} parent=51 // pred_check_branch
        %573 = sbr.rel (%p571) target = $region56
      $region55: #{chexnet_report_decoder_forward.12} parent=51 // pred_region
        %p574 = scmp.lt.s32.totalorder %s23, 1
        %s575 = scalar_select %p574, %s23, 1
        %p576 = scmp.lt.s32.totalorder %s24, 1
        %s577 = scalar_select %p576, %s24, 1
        %s578 = smul.addr %s577, 2
        %s579 = smul.addr %s575, 4
        %s580 = sadd.s32 %s578, %s579
        %s581 = smul.addr %s580, 4
        %s582 = scalar_lea.vmem %s4, %s581
      $region56: #{chexnet_report_decoder_forward.12} parent=51 // pred_fallthru
        _
    $region52: #{chexnet_report_decoder_forward.12} parent=5 // pred_fallthru
      _
  $region6: #{chexnet_report_decoder_forward.12} parent=0 // loop_footer
    %s14 = sadd.s32 1, %s10
  $region7: #{chexnet_report_decoder_forward.12} parent=0 // loop_footer_branch
    %9 = sbr.rel target = $region3
  $region8: #{chexnet_report_decoder_forward.12} parent=0 // loop_exit
    _

// kernel: chexnet_report_decoder_forward.13
$region0: #{chexnet_report_decoder_forward.13}
  #allocation0 [shape = 'u32[]', space=smem, size = 0x4, offset = 0x4, fixed_abs, tag = 'smem constant byte address 0x4 - core index']
  #allocation1 [shape = 'u32[72,128]{1,0:T(1,128)}', space=vmem, size = 0x9000, scoped, tag = 'internal scratch']
  %s0 = inlined_call_operand.vmem [shape: bf16[24,32], index: 0, kind: input, shape index: {}]
  %s1 = inlined_call_operand.vmem [shape: bf16[32,32], index: 1, kind: input, shape index: {}]
  %s2 = inlined_call_operand.vmem [shape: f32[1,32], index: 2, kind: input, shape index: {}]
  %s3 = inlined_call_operand.vmem [shape: f32[24,32], index: 3, kind: input, shape index: {}]
  %s4 = inlined_call_operand.vmem [shape: f32[24,32], index: 4, kind: output, shape index: {}]
  %s5 = sld [smem:[#allocation0]]
  $region26: #{chexnet_report_decoder_forward.13} parent=0
    _
  %s7 = ssub.s32 1, %s5
  %s8 = scalar_select 0, %s7, %s5
  // Predicated region
  $region2: #{chexnet_report_decoder_forward.13} parent=0 // pred_check
    _
  $region3: #{chexnet_report_decoder_forward.13} parent=0 // pred_check_branch
    %10 = sbr.rel (0) target = $region5
  $region4: #{chexnet_report_decoder_forward.13} parent=0 // pred_region
    _
  $region5: #{chexnet_report_decoder_forward.13} parent=0 // pred_fallthru
    _
  // Predicated region
  $region6: #{chexnet_report_decoder_forward.13} parent=0 // pred_check
    _
  $region7: #{chexnet_report_decoder_forward.13} parent=0 // pred_check_branch
    %12 = sbr.rel (0) target = $region9
  $region8: #{chexnet_report_decoder_forward.13} parent=0 // pred_region
    _
  $region9: #{chexnet_report_decoder_forward.13} parent=0 // pred_fallthru
    _
  // Predicated region
  $region10: #{chexnet_report_decoder_forward.13} parent=0 // pred_check
    _
  $region11: #{chexnet_report_decoder_forward.13} parent=0 // pred_check_branch
    %14 = sbr.rel (0) target = $region13
  $region12: #{chexnet_report_decoder_forward.13} parent=0 // pred_region
    _
  $region13: #{chexnet_report_decoder_forward.13} parent=0 // pred_fallthru
    _
  // Predicated region
  $region14: #{chexnet_report_decoder_forward.13} parent=0 // pred_check
    _
  $region15: #{chexnet_report_decoder_forward.13} parent=0 // pred_check_branch
    %16 = sbr.rel (0) target = $region17
  $region16: #{chexnet_report_decoder_forward.13} parent=0 // pred_region
    _
  $region17: #{chexnet_report_decoder_forward.13} parent=0 // pred_fallthru
    _
  %v18 = vld [vmem:[%s0] sm:$0xf]
  %v19 = vld [vmem:[%s0 + $0x4] sm:$0xf]
  %v20 = vld [vmem:[%s0 + $0x8] sm:$0xf]
  %v21 = vld [vmem:[%s1] sm:$0xf]
  %v22 = vld [vmem:[%s1 + $0x4] sm:$0xf]
  %v23 = vld [vmem:[%s1 + $0x8] sm:$0xf]
  %v24 = vld [vmem:[%s1 + $0xc] sm:$0xf]
  %v25 = vld [vmem:[%s2] sm:$0x1]
  %v27 = vperm.slane %v25, 0
  %v32 = vunpack.c.l.b16 %v18
  %v33 = vunpack.c.l.b16 %v19
  %v34 = vunpack.c.l.b16 %v20
  %v35 = vpack.c.b16 %v33, %v32
  %v36 = vpack.c.b16 %v34, %v34
  %v41 = vunpack.c.l.b16 %v21
  %v42 = vunpack.c.l.b16 %v22
  %v43 = vunpack.c.l.b16 %v23
  %v44 = vunpack.c.l.b16 %v24
  %v45 = vpack.c.b16 %v42, %v41
  %v46 = vpack.c.b16 %v44, %v43
  %vm49 = vcmask 261120
  %v51 = vsel %vm49, %v35, 0
  %v54 = vsel %vm49, %v36, 0
  %56 = vmatpush.bf16.msra.mxu0 0
  %57 = vmatpush.bf16.msra.mxu0 0
  %58 = vmatpush.bf16.msra.mxu0 0
  %59 = vmatpush.bf16.msra.mxu0 0
  %60 = vmatpush.bf16.msra.mxu0 0
  %61 = vmatpush.bf16.msra.mxu0 0
  %62 = vmatpush.bf16.msra.mxu0 %v46
  %63 = vmatpush.bf16.msra.mxu0 %v45
  %64 = vmatmul.bf16.gmra.mxu0 %v51
  %v65 = vpop.f32.mrf.mxu0
  %v66 = vadd.f32 %v27, %v65
  %v67 = vpop.f32.mrf.mxu0
  %v68 = vadd.f32 %v27, %v67
  %69 = vmatmul.bf16.gmra.mxu0 %v54
  %v70 = vpop.f32.mrf.mxu0
  %v71 = vadd.f32 %v27, %v70
  %v72 = vpop.f32.mrf.mxu0
  %73 = vdwg.mxu0
  %v74 = vld [vmem:[%s3] sm:$0xff]
  %v75 = vld [vmem:[%s3 + $0x8] sm:$0xff]
  %v76 = vld [vmem:[%s3 + $0x10] sm:$0xff]
  %v77 = vadd.f32 %v66, %v74
  %v78 = vadd.f32 %v68, %v75
  %v79 = vadd.f32 %v71, %v76
  %80 = vst.msk [vmem:[%s4] sm:$0xff] %vm49, %v77
  %81 = vst.msk [vmem:[%s4 + $0x8] sm:$0xff] %vm49, %v78
  %82 = vst.msk [vmem:[%s4 + $0x10] sm:$0xff] %vm49, %v79
  // Predicated region
  $region18: #{chexnet_report_decoder_forward.13} parent=0 // pred_check
    _
  $region19: #{chexnet_report_decoder_forward.13} parent=0 // pred_check_branch
    %84 = sbr.rel (0) target = $region21
  $region20: #{chexnet_report_decoder_forward.13} parent=0 // pred_region
    _
  $region21: #{chexnet_report_decoder_forward.13} parent=0 // pred_fallthru
    _
  // Predicated region
  $region22: #{chexnet_report_decoder_forward.13} parent=0 // pred_check
    _
  $region23: #{chexnet_report_decoder_forward.13} parent=0 // pred_check_branch
    %86 = sbr.rel (0) target = $region25
  $region24: #{chexnet_report_decoder_forward.13} parent=0 // pred_region
    _
  $region25: #{chexnet_report_decoder_forward.13} parent=0 // pred_fallthru
    _

// kernel: chexnet_report_decoder_forward.14
$region0: #{chexnet_report_decoder_forward.14}
  #allocation0 [shape = 'u32[]', space=smem, size = 0x4, offset = 0x4, fixed_abs, tag = 'smem constant byte address 0x4 - core index']
  #allocation1 [shape = 'u32[72,128]{1,0:T(1,128)}', space=vmem, size = 0x9000, scoped, tag = 'internal scratch']
  #allocation2 [shape = 'f32[24,32]{1,0:T(8,128)}', space=vmem, size = 0x3000, scoped, tag = 'scratch operand']
  #allocation3 [shape = 'bf16[24,32]{1,0:T(8,128)(2,1)}', space=vmem, size = 0x1800, scoped, tag = 'scratch operand']
  %s0 = inlined_call_operand.vmem [shape: f32[24,32], index: 0, kind: input, shape index: {}]
  %s1 = inlined_call_operand.vmem [shape: f32[1,32], index: 1, kind: input, shape index: {}]
  %s2 = inlined_call_operand.vmem [shape: f32[1,32], index: 2, kind: input, shape index: {}]
  %s3 = inlined_call_operand.vmem [shape: bf16[32,128], index: 3, kind: input, shape index: {}]
  %s4 = inlined_call_operand.vmem [shape: f32[1,128], index: 4, kind: input, shape index: {}]
  %s5 = inlined_call_operand.vmem [shape: bf16[128,32], index: 5, kind: input, shape index: {}]
  %s6 = inlined_call_operand.vmem [shape: f32[1,32], index: 6, kind: input, shape index: {}]
  %s7 = inlined_call_operand.vmem [shape: f32[24,32], index: 7, kind: output, shape index: {}]
  %s8 = sld [smem:[#allocation0]]
  $region46: #{chexnet_report_decoder_forward.14} parent=0
    _
  %s10 = ssub.s32 1, %s8
  %s11 = scalar_select 0, %s10, %s8
  // Predicated region
  $region2: #{chexnet_report_decoder_forward.14} parent=0 // pred_check
    _
  $region3: #{chexnet_report_decoder_forward.14} parent=0 // pred_check_branch
    %13 = sbr.rel (0) target = $region5
  $region4: #{chexnet_report_decoder_forward.14} parent=0 // pred_region
    _
  $region5: #{chexnet_report_decoder_forward.14} parent=0 // pred_fallthru
    _
  // Predicated region
  $region6: #{chexnet_report_decoder_forward.14} parent=0 // pred_check
    _
  $region7: #{chexnet_report_decoder_forward.14} parent=0 // pred_check_branch
    %15 = sbr.rel (0) target = $region9
  $region8: #{chexnet_report_decoder_forward.14} parent=0 // pred_region
    _
  $region9: #{chexnet_report_decoder_forward.14} parent=0 // pred_fallthru
    _
  // Predicated region
  $region10: #{chexnet_report_decoder_forward.14} parent=0 // pred_check
    _
  $region11: #{chexnet_report_decoder_forward.14} parent=0 // pred_check_branch
    %17 = sbr.rel (0) target = $region13
  $region12: #{chexnet_report_decoder_forward.14} parent=0 // pred_region
    _
  $region13: #{chexnet_report_decoder_forward.14} parent=0 // pred_fallthru
    _
  // Predicated region
  $region14: #{chexnet_report_decoder_forward.14} parent=0 // pred_check
    _
  $region15: #{chexnet_report_decoder_forward.14} parent=0 // pred_check_branch
    %19 = sbr.rel (0) target = $region17
  $region16: #{chexnet_report_decoder_forward.14} parent=0 // pred_region
    _
  $region17: #{chexnet_report_decoder_forward.14} parent=0 // pred_fallthru
    _
  // Predicated region
  $region18: #{chexnet_report_decoder_forward.14} parent=0 // pred_check
    _
  $region19: #{chexnet_report_decoder_forward.14} parent=0 // pred_check_branch
    %21 = sbr.rel (0) target = $region21
  $region20: #{chexnet_report_decoder_forward.14} parent=0 // pred_region
    _
  $region21: #{chexnet_report_decoder_forward.14} parent=0 // pred_fallthru
    _
  // Predicated region
  $region22: #{chexnet_report_decoder_forward.14} parent=0 // pred_check
    _
  $region23: #{chexnet_report_decoder_forward.14} parent=0 // pred_check_branch
    %23 = sbr.rel (0) target = $region25
  $region24: #{chexnet_report_decoder_forward.14} parent=0 // pred_region
    _
  $region25: #{chexnet_report_decoder_forward.14} parent=0 // pred_fallthru
    _
  // Predicated region
  $region26: #{chexnet_report_decoder_forward.14} parent=0 // pred_check
    _
  $region27: #{chexnet_report_decoder_forward.14} parent=0 // pred_check_branch
    %25 = sbr.rel (0) target = $region29
  $region28: #{chexnet_report_decoder_forward.14} parent=0 // pred_region
    _
  $region29: #{chexnet_report_decoder_forward.14} parent=0 // pred_fallthru
    _
  %p27 = scmp.eq.s32.totalorder 0, 0
  // Predicated region
  $region30: #{chexnet_report_decoder_forward.14} parent=0 // pred_check
    %p28 = pneg %p27
  $region31: #{chexnet_report_decoder_forward.14} parent=0 // pred_check_branch
    %30 = sbr.rel (%p28) target = $region33
  $region32: #{chexnet_report_decoder_forward.14} parent=0 // pred_region
    %v31 = vld [vmem:[%s0] sm:$0xff]
    %v32 = vld [vmem:[%s0 + $0x8] sm:$0xff]
    %v33 = vld [vmem:[%s0 + $0x10] sm:$0xff]
    %vm34 = vcmask 261120
    %v35 = vsel %vm34, %v31, 0.0
    %36 = vadd.xlane.f32.xlu0 %v35
    %v37 = vpop.xlane.xlu0 %36
    %v38 = vsel %vm34, %v32, 0.0
    %39 = vadd.xlane.f32.xlu0 %v38
    %v40 = vpop.xlane.xlu0 %39
    %v41 = vsel %vm34, %v33, 0.0
    %42 = vadd.xlane.f32.xlu0 %v41
    %v43 = vpop.xlane.xlu0 %42
    %v44 = vrcp.pop 32.0
    %v45 = vmul.f32 32.0, %v44
    %v46 = vsub.f32 1.0, %v45
    %v47 = vmul.f32 %v44, %v46
    %v48 = vadd.f32 %v44, %v47
    %vm49 = vweird.f32 %v44
    %v50 = vsel %vm49, %v44, %v48
    %v51 = vmul.f32 %v37, %v50
    %v52 = vmul.f32 %v40, %v50
    %v53 = vmul.f32 %v43, %v50
    %v54 = vsub.f32 %v31, %v51
    %v55 = vsub.f32 %v32, %v52
    %v56 = vsub.f32 %v33, %v53
    %v57 = vmul.f32 %v54, %v54
    %v58 = vmul.f32 %v55, %v55
    %v59 = vmul.f32 %v56, %v56
    %v60 = vsel %vm34, %v57, 0.0
    %61 = vadd.xlane.f32.xlu0 %v60
    %v62 = vpop.xlane.xlu0 %61
    %v63 = vsel %vm34, %v58, 0.0
    %64 = vadd.xlane.f32.xlu0 %v63
    %v65 = vpop.xlane.xlu0 %64
    %v66 = vsel %vm34, %v59, 0.0
    %67 = vadd.xlane.f32.xlu0 %v66
    %v68 = vpop.xlane.xlu0 %67
    %v69 = vmul.f32 %v62, %v50
    %v70 = vmul.f32 %v65, %v50
    %v71 = vmul.f32 %v68, %v50
    %v72 = vadd.f32 %v69, 1e-05
    %v73 = vadd.f32 %v70, 1e-05
    %v74 = vadd.f32 %v71, 1e-05
    %v75 = vrsqrt.pop %v72
    %v76 = vmul.f32 %v75, %v72
    %v77 = vmul.f32 %v76, %v75
    %v78 = vmul.f32 0.5, %v77
    %v79 = vsub.f32 1.5, %v78
    %v80 = vmul.f32 %v75, %v79
    %vm81 = vweird.f32 %v72
    %vm82 = vweird.f32 %v75
    %vm83 = vmor %vm81, %vm82
    %v84 = vsel %vm83, %v75, %v80
    %v85 = vrsqrt.pop %v73
    %v86 = vmul.f32 %v85, %v73
    %v87 = vmul.f32 %v86, %v85
    %v88 = vmul.f32 0.5, %v87
    %v89 = vsub.f32 1.5, %v88
    %v90 = vmul.f32 %v85, %v89
    %vm91 = vweird.f32 %v73
    %vm92 = vweird.f32 %v85
    %vm93 = vmor %vm91, %vm92
    %v94 = vsel %vm93, %v85, %v90
    %v95 = vrsqrt.pop %v74
    %v96 = vmul.f32 %v95, %v74
    %v97 = vmul.f32 %v96, %v95
    %v98 = vmul.f32 0.5, %v97
    %v99 = vsub.f32 1.5, %v98
    %v100 = vmul.f32 %v95, %v99
    %vm101 = vweird.f32 %v74
    %vm102 = vweird.f32 %v95
    %vm103 = vmor %vm101, %vm102
    %v104 = vsel %vm103, %v95, %v100
    %v105 = vmul.f32 %v54, %v84
    %v106 = vmul.f32 %v55, %v94
    %v107 = vmul.f32 %v56, %v104
    %v108 = vld [vmem:[%s1] sm:$0x1]
    %v110 = vperm.slane %v108, 0
    %v112 = vmul.f32 %v105, %v110
    %v113 = vmul.f32 %v106, %v110
    %v114 = vmul.f32 %v107, %v110
    %v115 = vld [vmem:[%s2] sm:$0x1]
    %v117 = vperm.slane %v115, 0
    %v119 = vadd.f32 %v112, %v117
    %v120 = vadd.f32 %v113, %v117
    %v121 = vadd.f32 %v114, %v117
    %v122 = vpack.c.bf16 %v119, %v119
    %v123 = vpack.c.bf16 %v120, %v120
    %v124 = vpack.c.bf16 %v121, %v121
    %vm125 = vcmask 257024
    %126 = vst.msk [vmem:[#allocation3] sm:$0xf] %vm125, %v122
    %127 = vst.msk [vmem:[#allocation3 + $0x4] sm:$0xf] %vm125, %v123
    %128 = vst.msk [vmem:[#allocation3 + $0x8] sm:$0xf] %vm125, %v124
    %129 = vst.msk [vmem:[#allocation2] sm:$0xff] %vm34, 0.0
    %130 = vst.msk [vmem:[#allocation2 + $0x8] sm:$0xff] %vm34, 0.0
    %131 = vst.msk [vmem:[#allocation2 + $0x10] sm:$0xff] %vm34, 0.0
  $region33: #{chexnet_report_decoder_forward.14} parent=0 // pred_fallthru
    _
  %v132 = vld [vmem:[#allocation3] sm:$0xf]
  %v133 = vld [vmem:[#allocation3 + $0x4] sm:$0xf]
  %v134 = vld [vmem:[#allocation3 + $0x8] sm:$0xf]
  %v135 = vld [vmem:[%s3] sm:$0xf]
  %v136 = vld [vmem:[%s3 + $0x4] sm:$0xf]
  %v137 = vld [vmem:[%s3 + $0x8] sm:$0xf]
  %v138 = vld [vmem:[%s3 + $0xc] sm:$0xf]
  %v139 = vld [vmem:[%s4] sm:$0x1]
  %v141 = vperm.slane %v139, 0
  %v146 = vunpack.c.l.b16 %v132
  %v147 = vunpack.c.l.b16 %v133
  %v148 = vunpack.c.l.b16 %v134
  %v149 = vpack.c.b16 %v147, %v146
  %v150 = vpack.c.b16 %v148, %v148
  %v155 = vunpack.c.l.b16 %v135
  %v156 = vunpack.c.l.b16 %v136
  %v157 = vunpack.c.l.b16 %v137
  %v158 = vunpack.c.l.b16 %v138
  %v159 = vpack.c.b16 %v156, %v155
  %v160 = vpack.c.b16 %v158, %v157
  %vm163 = vcmask 261120
  %v165 = vsel %vm163, %v149, 0
  %v168 = vsel %vm163, %v150, 0
  %170 = vmatpush.bf16.msra.mxu0 0
  %171 = vmatpush.bf16.msra.mxu0 0
  %172 = vmatpush.bf16.msra.mxu0 0
  %173 = vmatpush.bf16.msra.mxu0 0
  %174 = vmatpush.bf16.msra.mxu0 0
  %175 = vmatpush.bf16.msra.mxu0 0
  %176 = vmatpush.bf16.msra.mxu0 %v160
  %177 = vmatpush.bf16.msra.mxu0 %v159
  %178 = vmatmul.bf16.gmra.mxu0 %v165
  %v179 = vpop.f32.mrf.mxu0
  %v180 = vadd.f32 %v141, %v179
  %v181 = vpop.f32.mrf.mxu0
  %v182 = vadd.f32 %v141, %v181
  %183 = vmatmul.bf16.gmra.mxu0 %v168
  %v184 = vpop.f32.mrf.mxu0
  %v185 = vadd.f32 %v141, %v184
  %v186 = vpop.f32.mrf.mxu0
  %187 = vdwg.mxu0
  %v188 = vmul.f32 %v180, 0.5
  %v189 = vmul.f32 %v182, 0.5
  %v190 = vmul.f32 %v185, 0.5
  %v191 = vmul.f32 %v180, 0.044715
  %v192 = vmul.f32 %v182, 0.044715
  %v193 = vmul.f32 %v185, 0.044715
  %v194 = vmul.f32 %v191, %v180
  %v195 = vmul.f32 %v192, %v182
  %v196 = vmul.f32 %v193, %v185
  %v197 = vmul.f32 %v194, %v180
  %v198 = vmul.f32 %v195, %v182
  %v199 = vmul.f32 %v196, %v185
  %v200 = vadd.f32 %v180, %v197
  %v201 = vadd.f32 %v182, %v198
  %v202 = vadd.f32 %v185, %v199
  %v203 = vmul.f32 %v200, 0.7978846
  %v204 = vmul.f32 %v201, 0.7978846
  %v205 = vmul.f32 %v202, 0.7978846
  %v206 = vtanh.pop %v203
  %v207 = vtanh.pop %v204
  %v208 = vtanh.pop %v205
  %v209 = vadd.f32 %v206, 1.0
  %v210 = vadd.f32 %v207, 1.0
  %v211 = vadd.f32 %v208, 1.0
  %v212 = vmul.f32 %v188, %v209
  %v213 = vmul.f32 %v189, %v210
  %v214 = vmul.f32 %v190, %v211
  %v215 = vld [vmem:[#allocation2] sm:$0xff]
  %v216 = vld [vmem:[#allocation2 + $0x8] sm:$0xff]
  %v217 = vld [vmem:[#allocation2 + $0x10] sm:$0xff]
  %v218 = vpack.c.bf16 %v213, %v212
  %v219 = vpack.c.bf16 %v214, %v214
  %v220 = vld [vmem:[%s5] sm:$0xf]
  %v221 = vld [vmem:[%s5 + $0x4] sm:$0xf]
  %v222 = vld [vmem:[%s5 + $0x8] sm:$0xf]
  %v223 = vld [vmem:[%s5 + $0xc] sm:$0xf]
  %v224 = vld [vmem:[%s5 + $0x10] sm:$0xf]
  %v225 = vld [vmem:[%s5 + $0x14] sm:$0xf]
  %v226 = vld [vmem:[%s5 + $0x18] sm:$0xf]
  %v227 = vld [vmem:[%s5 + $0x1c] sm:$0xf]
  %v228 = vld [vmem:[%s5 + $0x20] sm:$0xf]
  %v229 = vld [vmem:[%s5 + $0x24] sm:$0xf]
  %v230 = vld [vmem:[%s5 + $0x28] sm:$0xf]
  %v231 = vld [vmem:[%s5 + $0x2c] sm:$0xf]
  %v232 = vld [vmem:[%s5 + $0x30] sm:$0xf]
  %v233 = vld [vmem:[%s5 + $0x34] sm:$0xf]
  %v234 = vld [vmem:[%s5 + $0x38] sm:$0xf]
  %v235 = vld [vmem:[%s5 + $0x3c] sm:$0xf]
  %v252 = vunpack.c.l.b16 %v220
  %v253 = vunpack.c.l.b16 %v221
  %v254 = vunpack.c.l.b16 %v222
  %v255 = vunpack.c.l.b16 %v223
  %v256 = vunpack.c.l.b16 %v224
  %v257 = vunpack.c.l.b16 %v225
  %v258 = vunpack.c.l.b16 %v226
  %v259 = vunpack.c.l.b16 %v227
  %v260 = vunpack.c.l.b16 %v228
  %v261 = vunpack.c.l.b16 %v229
  %v262 = vunpack.c.l.b16 %v230
  %v263 = vunpack.c.l.b16 %v231
  %v264 = vunpack.c.l.b16 %v232
  %v265 = vunpack.c.l.b16 %v233
  %v266 = vunpack.c.l.b16 %v234
  %v267 = vunpack.c.l.b16 %v235
  %v268 = vpack.c.b16 %v253, %v252
  %v269 = vpack.c.b16 %v255, %v254
  %v270 = vpack.c.b16 %v257, %v256
  %v271 = vpack.c.b16 %v259, %v258
  %v272 = vpack.c.b16 %v261, %v260
  %v273 = vpack.c.b16 %v263, %v262
  %v274 = vpack.c.b16 %v265, %v264
  %v275 = vpack.c.b16 %v267, %v266
  %284 = vmatpush.bf16.msra.mxu0 %v275
  %285 = vmatpush.bf16.msra.mxu0 %v274
  %286 = vmatpush.bf16.msra.mxu0 %v273
  %287 = vmatpush.bf16.msra.mxu0 %v272
  %288 = vmatpush.bf16.msra.mxu0 %v271
  %289 = vmatpush.bf16.msra.mxu0 %v270
  %290 = vmatpush.bf16.msra.mxu0 %v269
  %291 = vmatpush.bf16.msra.mxu0 %v268
  %292 = vmatmul.bf16.gmra.mxu0 %v218
  %v293 = vpop.f32.mrf.mxu0
  %v294 = vadd.f32 0.0, %v293
  %v295 = vpop.f32.mrf.mxu0
  %v296 = vadd.f32 0.0, %v295
  %297 = vmatmul.bf16.gmra.mxu0 %v219
  %v298 = vpop.f32.mrf.mxu0
  %v299 = vadd.f32 0.0, %v298
  %v300 = vpop.f32.mrf.mxu0
  %301 = vdwg.mxu0
  %v302 = vadd.f32 %v215, %v294
  %v303 = vadd.f32 %v216, %v296
  %v304 = vadd.f32 %v217, %v299
  %305 = vst.msk [vmem:[#allocation2] sm:$0xff] %vm163, %v302
  %306 = vst.msk [vmem:[#allocation2 + $0x8] sm:$0xff] %vm163, %v303
  %307 = vst.msk [vmem:[#allocation2 + $0x10] sm:$0xff] %vm163, %v304
  // Predicated region
  $region34: #{chexnet_report_decoder_forward.14} parent=0 // pred_check
    %p308 = pneg %p27
  $region35: #{chexnet_report_decoder_forward.14} parent=0 // pred_check_branch
    %310 = sbr.rel (%p308) target = $region37
  $region36: #{chexnet_report_decoder_forward.14} parent=0 // pred_region
    %v311 = vld [vmem:[#allocation2] sm:$0xff]
    %v312 = vld [vmem:[#allocation2 + $0x8] sm:$0xff]
    %v313 = vld [vmem:[#allocation2 + $0x10] sm:$0xff]
    %v314 = vld [vmem:[%s6] sm:$0x1]
    %v316 = vperm.slane %v314, 0
    %v318 = vadd.f32 %v311, %v316
    %v319 = vadd.f32 %v312, %v316
    %v320 = vadd.f32 %v313, %v316
    %v321 = vld [vmem:[%s0] sm:$0xff]
    %v322 = vld [vmem:[%s0 + $0x8] sm:$0xff]
    %v323 = vld [vmem:[%s0 + $0x10] sm:$0xff]
    %v324 = vadd.f32 %v318, %v321
    %v325 = vadd.f32 %v319, %v322
    %v326 = vadd.f32 %v320, %v323
    %327 = vst.msk [vmem:[%s7] sm:$0xff] %vm163, %v324
    %328 = vst.msk [vmem:[%s7 + $0x8] sm:$0xff] %vm163, %v325
    %329 = vst.msk [vmem:[%s7 + $0x10] sm:$0xff] %vm163, %v326
  $region37: #{chexnet_report_decoder_forward.14} parent=0 // pred_fallthru
    _
  // Predicated region
  $region38: #{chexnet_report_decoder_forward.14} parent=0 // pred_check
    _
  $region39: #{chexnet_report_decoder_forward.14} parent=0 // pred_check_branch
    %331 = sbr.rel (0) target = $region41
  $region40: #{chexnet_report_decoder_forward.14} parent=0 // pred_region
    _
  $region41: #{chexnet_report_decoder_forward.14} parent=0 // pred_fallthru
    _
  // Predicated region
  $region42: #{chexnet_report_decoder_forward.14} parent=0 // pred_check
    _
  $region43: #{chexnet_report_decoder_forward.14} parent=0 // pred_check_branch
    %333 = sbr.rel (0) target = $region45
  $region44: #{chexnet_report_decoder_forward.14} parent=0 // pred_region
    _
  $region45: #{chexnet_report_decoder_forward.14} parent=0 // pred_fallthru
    _

// kernel: chexnet_report_decoder_forward.19
$region0: #{chexnet_report_decoder_forward.19}
  #allocation0 [shape = 'u32[]', space=smem, size = 0x4, offset = 0x4, fixed_abs, tag = 'smem constant byte address 0x4 - core index']
  #allocation1 [shape = 'u32[72,128]{1,0:T(1,128)}', space=vmem, size = 0x9000, scoped, tag = 'internal scratch']
  %s0 = inlined_call_operand.vmem [shape: f32[16,32], index: 0, kind: input, shape index: {}]
  %s1 = inlined_call_operand.vmem [shape: bf16[64,32], index: 1, kind: input, shape index: {}]
  %s2 = inlined_call_operand.vmem [shape: f32[1,32], index: 2, kind: input, shape index: {}]
  %s3 = inlined_call_operand.vmem [shape: f32[1,32], index: 3, kind: input, shape index: {}]
  %s4 = inlined_call_operand.hbm [shape: f32[16,64], index: 4, kind: output, shape index: {}]
  %s5 = sld [smem:[#allocation0]]
  $region26: #{chexnet_report_decoder_forward.19} parent=0
    _
  %s7 = ssub.s32 1, %s5
  %s8 = scalar_select 0, %s7, %s5
  $region1: #{chexnet_report_decoder_forward.19} parent=0
    #allocation2 [shape = 'u8[8192]{0}', space=vmem, size = 0x2000, scoped, tag = 'output window, operand 0, single buffered']
    #allocation3 [shape = 's32[1]{0}', space=sflag, size = 0x4, scoped, tag = 'scoped memory for chexnet_report_decoder_forward.19']
    %9 = vsyncpa [#allocation3], 0
    // Predicated region
    $region2: #{chexnet_report_decoder_forward.19} parent=1 // pred_check
      _
    $region3: #{chexnet_report_decoder_forward.19} parent=1 // pred_check_branch
      %11 = sbr.rel (0) target = $region5
    $region4: #{chexnet_report_decoder_forward.19} parent=1 // pred_region
      _
    $region5: #{chexnet_report_decoder_forward.19} parent=1 // pred_fallthru
      _
    // Predicated region
    $region6: #{chexnet_report_decoder_forward.19} parent=1 // pred_check
      _
    $region7: #{chexnet_report_decoder_forward.19} parent=1 // pred_check_branch
      %13 = sbr.rel (0) target = $region9
    $region8: #{chexnet_report_decoder_forward.19} parent=1 // pred_region
      _
    $region9: #{chexnet_report_decoder_forward.19} parent=1 // pred_fallthru
      _
    // Predicated region
    $region10: #{chexnet_report_decoder_forward.19} parent=1 // pred_check
      _
    $region11: #{chexnet_report_decoder_forward.19} parent=1 // pred_check_branch
      %15 = sbr.rel (0) target = $region13
    $region12: #{chexnet_report_decoder_forward.19} parent=1 // pred_region
      _
    $region13: #{chexnet_report_decoder_forward.19} parent=1 // pred_fallthru
      _
    // Predicated region
    $region14: #{chexnet_report_decoder_forward.19} parent=1 // pred_check
      _
    $region15: #{chexnet_report_decoder_forward.19} parent=1 // pred_check_branch
      %17 = sbr.rel (0) target = $region17
    $region16: #{chexnet_report_decoder_forward.19} parent=1 // pred_region
      _
    $region17: #{chexnet_report_decoder_forward.19} parent=1 // pred_fallthru
      _
    %v19 = vld [vmem:[%s0] sm:$0xff]
    %v20 = vld [vmem:[%s0 + $0x8] sm:$0xff]
    %vm21 = vcmask 261120
    %v22 = vsel %vm21, %v19, 0.0
    %23 = vadd.xlane.f32.xlu0 %v22
    %v24 = vpop.xlane.xlu0 %23
    %v25 = vsel %vm21, %v20, 0.0
    %26 = vadd.xlane.f32.xlu0 %v25
    %v27 = vpop.xlane.xlu0 %26
    %v28 = vrcp.pop 32.0
    %v29 = vmul.f32 32.0, %v28
    %v30 = vsub.f32 1.0, %v29
    %v31 = vmul.f32 %v28, %v30
    %v32 = vadd.f32 %v28, %v31
    %vm33 = vweird.f32 %v28
    %v34 = vsel %vm33, %v28, %v32
    %v35 = vmul.f32 %v24, %v34
    %v36 = vmul.f32 %v27, %v34
    %v37 = vsub.f32 %v19, %v35
    %v38 = vsub.f32 %v20, %v36
    %v39 = vmul.f32 %v37, %v37
    %v40 = vmul.f32 %v38, %v38
    %v41 = vsel %vm21, %v39, 0.0
    %42 = vadd.xlane.f32.xlu0 %v41
    %v43 = vpop.xlane.xlu0 %42
    %v44 = vsel %vm21, %v40, 0.0
    %45 = vadd.xlane.f32.xlu0 %v44
    %v46 = vpop.xlane.xlu0 %45
    %v47 = vmul.f32 %v43, %v34
    %v48 = vmul.f32 %v46, %v34
    %v49 = vadd.f32 %v47, 1e-05
    %v50 = vadd.f32 %v48, 1e-05
    %v51 = vrsqrt.pop %v49
    %v52 = vmul.f32 %v51, %v49
    %v53 = vmul.f32 %v52, %v51
    %v54 = vmul.f32 0.5, %v53
    %v55 = vsub.f32 1.5, %v54
    %v56 = vmul.f32 %v51, %v55
    %vm57 = vweird.f32 %v49
    %vm58 = vweird.f32 %v51
    %vm59 = vmor %vm57, %vm58
    %v60 = vsel %vm59, %v51, %v56
    %v61 = vrsqrt.pop %v50
    %v62 = vmul.f32 %v61, %v50
    %v63 = vmul.f32 %v62, %v61
    %v64 = vmul.f32 0.5, %v63
    %v65 = vsub.f32 1.5, %v64
    %v66 = vmul.f32 %v61, %v65
    %vm67 = vweird.f32 %v50
    %vm68 = vweird.f32 %v61
    %vm69 = vmor %vm67, %vm68
    %v70 = vsel %vm69, %v61, %v66
    %v71 = vmul.f32 %v37, %v60
    %v72 = vmul.f32 %v38, %v70
    %v73 = vld [vmem:[%s2] sm:$0x1]
    %v75 = vperm.slane %v73, 0
    %v77 = vmul.f32 %v71, %v75
    %v78 = vmul.f32 %v72, %v75
    %v79 = vld [vmem:[%s3] sm:$0x1]
    %v81 = vperm.slane %v79, 0
    %v83 = vadd.f32 %v77, %v81
    %v84 = vadd.f32 %v78, %v81
    %v85 = vpack.c.bf16 %v84, %v83
    %v86 = vld [vmem:[%s1] sm:$0xf]
    %v87 = vld [vmem:[%s1 + $0x4] sm:$0xf]
    %v88 = vld [vmem:[%s1 + $0x8] sm:$0xf]
    %v89 = vld [vmem:[%s1 + $0xc] sm:$0xf]
    %v90 = vld [vmem:[%s1 + $0x10] sm:$0xf]
    %v91 = vld [vmem:[%s1 + $0x14] sm:$0xf]
    %v92 = vld [vmem:[%s1 + $0x18] sm:$0xf]
    %v93 = vld [vmem:[%s1 + $0x1c] sm:$0xf]
    %v102 = vunpack.c.l.b16 %v86
    %v103 = vunpack.c.l.b16 %v87
    %v104 = vunpack.c.l.b16 %v88
    %v105 = vunpack.c.l.b16 %v89
    %v106 = vunpack.c.l.b16 %v90
    %v107 = vunpack.c.l.b16 %v91
    %v108 = vunpack.c.l.b16 %v92
    %v109 = vunpack.c.l.b16 %v93
    %v110 = vpack.c.b16 %v103, %v102
    %v111 = vpack.c.b16 %v105, %v104
    %v112 = vpack.c.b16 %v107, %v106
    %v113 = vpack.c.b16 %v109, %v108
    %v115 = vsel %vm21, %v85, 0
    %v118 = vsel %vm21, %v110, 0
    %v121 = vsel %vm21, %v111, 0
    %v124 = vsel %vm21, %v112, 0
    %v127 = vsel %vm21, %v113, 0
    %129 = vmatpush.bf16.xpose.msra.mxu0 0
    %130 = vmatpush.bf16.xpose.msra.mxu0 0
    %131 = vmatpush.bf16.xpose.msra.mxu0 0
    %132 = vmatpush.bf16.xpose.msra.mxu0 0
    %133 = vmatpush.bf16.xpose.msra.mxu0 %v127
    %134 = vmatpush.bf16.xpose.msra.mxu0 %v124
    %135 = vmatpush.bf16.xpose.msra.mxu0 %v121
    %136 = vmatpush.bf16.xpose.msra.mxu0 %v118
    %137 = vmatmul.bf16.gmra.mxu0 %v115
    %v138 = vpop.f32.mrf.mxu0
    %v139 = vadd.f32 0.0, %v138
    %v140 = vpop.f32.mrf.mxu0
    %v141 = vadd.f32 0.0, %v140
    %142 = vdwg.mxu0
    %vm143 = vcmask 523264
    %144 = vst.msk [vmem:[#allocation2] sm:$0xff] %vm143, %v139
    %145 = vst.msk [vmem:[#allocation2 + $0x8] sm:$0xff] %vm143, %v141
    // Predicated region
    $region18: #{chexnet_report_decoder_forward.19} parent=1 // pred_check
      _
    $region19: #{chexnet_report_decoder_forward.19} parent=1 // pred_check_branch
      %147 = sbr.rel (0) target = $region21
    $region20: #{chexnet_report_decoder_forward.19} parent=1 // pred_region
      %149 = vsyncadd [#allocation3], 0
      %s150 = sshll.u32 [#allocation2], 4
      %s151 = int_to_ptr.vmem [resolvable:$true] %s150
      %s152 = sshll.u32 %s4, 4
      %s153 = int_to_ptr.hbm [resolvable:$true] %s152
      %158 = dma.vmem_to_hbm [thread:$0]  %s151, 256, %s153, [#allocation3], 128, 128, 8
    $region21: #{chexnet_report_decoder_forward.19} parent=1 // pred_fallthru
      _
    // Predicated region
    $region22: #{chexnet_report_decoder_forward.19} parent=1 // pred_check
      _
    $region23: #{chexnet_report_decoder_forward.19} parent=1 // pred_check_branch
      %160 = sbr.rel (0) target = $region25
    $region24: #{chexnet_report_decoder_forward.19} parent=1 // pred_region
      %162 = dma.done [#allocation3], 256
    $region25: #{chexnet_report_decoder_forward.19} parent=1 // pred_fallthru
      _
    %163 = vsyncpa [#allocation3], 1

</llo_original>
